<compile_context>
chip_gen: v7x
topology: tpu7x:2x2x1
jax: 0.10.0
libtpu: 0.0.40
codegen_flags: <defaults>
</compile_context>

<pallas_src>
import functools

import jax
import jax.numpy as jnp
from jax.experimental import pallas as pl
from jax.experimental.pallas import tpu as pltpu


# ----------------------------------------------------------------------------
# Kernel: one grid step == one encoder layer applied to one batch tile
# ----------------------------------------------------------------------------
def encoder_kernel(x_ref, mask_ref, pos_ref,
                   wqkv_ref, bqkv_ref, wo_ref,
                   w1_ref, b1_ref, w2_ref, lnb_ref,
                   out_ref, attn_ref, *, num_head):
    Bt, S, D = x_ref.shape
    R = Bt * S
    H = num_head
    dh = D // H
    eps = 1e-6                      # spec: nn.LayerNorm(d_model, eps=1e-06)
    layer = pl.program_id(1)

    # ---- layer 0 only: x * sqrt(d_model) + positional encoding --------------
    # TODO(synk): dropout / dropout1 / dropout2 are identity (inference).
    @pl.when(layer == 0)
    def _():
        x3 = x_ref[...].astype(jnp.float32) * (float(D) ** 0.5) + pos_ref[0]
        out_ref[...] = x3.reshape(R, D)

    xf = out_ref[...]                                      # (R, D) f32, resident

    # key-padding mask: 1.0 marks a padded key -> large negative logit.
    # Broadcast hoisted out of the head loop (once per layer).
    neg = mask_ref[...].astype(jnp.float32) * (-1e9)       # (Bt, 1, S)
    neg = jnp.broadcast_to(neg, (Bt, S, S))

    wqkv = wqkv_ref[0]              # (D, 3D) bf16, 1/sqrt(dh) folded into Q cols
    wo = wo_ref[0]                  # (D, D)  bf16
    w1 = w1_ref[0]                  # (D, F)  bf16
    w2 = w2_ref[0]                  # (F, D)  bf16
    bqkv = bqkv_ref[0]              # (1, 3D) f32
    b1 = b1_ref[0]                  # (1, F)  f32
    lnb = lnb_ref[0]                # (6, D)  f32
    g1, be1 = lnb[0:1, :], lnb[1:2, :]
    g2, be2 = lnb[2:3, :], lnb[3:4, :]
    bo, b2 = lnb[4:5, :], lnb[5:6, :]

    # ---- multi-head self-attention (packed QKV, single K=D out-projection) ---
    qkv = jnp.dot(xf.astype(jnp.bfloat16), wqkv,
                  preferred_element_type=jnp.float32) + bqkv        # (R, 3D) f32
    # Heads stay a small static loop: Mosaic dot_general supports one batch dim,
    # so each head uses a single-batch einsum; outputs land in attn_ref.
    for h in range(H):
        q = qkv[:, h * dh:(h + 1) * dh].reshape(Bt, S, dh).astype(jnp.bfloat16)
        k = qkv[:, D + h * dh:D + (h + 1) * dh].reshape(Bt, S, dh).astype(jnp.bfloat16)
        v = qkv[:, 2 * D + h * dh:2 * D + (h + 1) * dh].reshape(Bt, S, dh).astype(jnp.bfloat16)
        s = jnp.einsum('bqd,bkd->bqk', q, k,
                       preferred_element_type=jnp.float32) + neg    # (Bt, S, S)
        s = s - jnp.max(s, axis=-1, keepdims=True)
        p = jnp.exp(s)
        p = p / jnp.sum(p, axis=-1, keepdims=True)       # exact softmax (f32)
        oh = jnp.einsum('bqk,bkd->bqd', p.astype(jnp.bfloat16), v,
                        preferred_element_type=jnp.float32)         # (Bt, S, dh)
        attn_ref[:, h * dh:(h + 1) * dh] = oh.reshape(R, dh)
    # one K = D output projection over all heads (instead of H matmuls of K=dh)
    attn = jnp.dot(attn_ref[...].astype(jnp.bfloat16), wo,
                   preferred_element_type=jnp.float32) + bo

    # ---- Add & LayerNorm 1 ----------------------------------------------------
    h1 = xf + attn
    mu1 = jnp.mean(h1, axis=-1, keepdims=True)
    var1 = jnp.mean((h1 - mu1) ** 2, axis=-1, keepdims=True)
    out1 = (h1 - mu1) * jax.lax.rsqrt(var1 + eps) * g1 + be1

    # ---- FFN: Linear -> ReLU -> Linear ---------------------------------------
    f = jnp.maximum(jnp.dot(out1.astype(jnp.bfloat16), w1,
                            preferred_element_type=jnp.float32) + b1, 0.0)
    ffn = jnp.dot(f.astype(jnp.bfloat16), w2,
                  preferred_element_type=jnp.float32) + b2

    # ---- Add & LayerNorm 2 -> becomes next layer's input ----------------------
    h2 = out1 + ffn
    mu2 = jnp.mean(h2, axis=-1, keepdims=True)
    var2 = jnp.mean((h2 - mu2) ** 2, axis=-1, keepdims=True)
    out_ref[...] = (h2 - mu2) * jax.lax.rsqrt(var2 + eps) * g2 + be2


# ----------------------------------------------------------------------------
# VMEM budget: one layer of (double-buffered) weights + activation slab.
# 32-64 MiB is safe on every generation (v7x physical VMEM is 64 MiB/TC;
# v5e/v6e have 128 MiB and can be pushed higher for big shapes).
# ----------------------------------------------------------------------------
def _vmem_limit_bytes(rows, S, D, F):
    bf16, f32 = 2, 4
    per_layer_w = (D * 3 * D + D * D + D * F + F * D) * bf16 \
        + (3 * D + F + 6 * D) * f32
    io_blocks = (rows * D * 2 + rows + S * D) * f32     # x/out blocks, mask, pos
    scratch = rows * D * f32
    est = 2 * (per_layer_w + io_blocks) + scratch + (8 << 20)
    return int(max(32 << 20, min(est, 64 << 20)))


# ----------------------------------------------------------------------------
# Wrapper: single pallas_call for the whole encoder
# ----------------------------------------------------------------------------
def transformer_encoder(x, mask, pos, params, num_head, batch_tiles=None):
    B, S, D = x.shape
    L, _, F = params["w1"].shape
    if batch_tiles is None:
        # Split the batch over the "parallel" grid axis so v7x's two TensorCores
        # both get work; single-TC chips just run the tiles sequentially.
        batch_tiles = 2 if (B % 2 == 0 and ((B // 2) * S) % 8 == 0) else 1
    assert B % batch_tiles == 0
    Bt = B // batch_tiles
    R = Bt * S

    # Fold the 1/sqrt(d_head) attention scale into the Q columns of Wqkv/bqkv
    # (zero runtime cost in the kernel).
    dh = D // num_head
    qscale = jnp.concatenate([jnp.full((D,), dh ** -0.5, jnp.float32),
                              jnp.ones((2 * D,), jnp.float32)])
    wqkv = (params["wqkv"].astype(jnp.float32) * qscale).astype(jnp.bfloat16)
    bqkv = params["bqkv"].astype(jnp.float32) * qscale

    out_flat = pl.pallas_call(
        functools.partial(encoder_kernel, num_head=num_head),
        out_shape=jax.ShapeDtypeStruct((B * S, D), jnp.float32),
        grid=(batch_tiles, L),
        in_specs=[
            pl.BlockSpec((Bt, S, D), lambda b, l: (b, 0, 0)),       # x
            pl.BlockSpec((Bt, 1, S), lambda b, l: (b, 0, 0)),       # key-pad mask
            pl.BlockSpec((1, S, D), lambda b, l: (0, 0, 0)),        # pos encoding
            pl.BlockSpec((1, D, 3 * D), lambda b, l: (l, 0, 0)),    # Wqkv (bf16)
            pl.BlockSpec((1, 1, 3 * D), lambda b, l: (l, 0, 0)),    # bqkv (f32)
            pl.BlockSpec((1, D, D), lambda b, l: (l, 0, 0)),        # Wo   (bf16)
            pl.BlockSpec((1, D, F), lambda b, l: (l, 0, 0)),        # W1   (bf16)
            pl.BlockSpec((1, 1, F), lambda b, l: (l, 0, 0)),        # b1   (f32)
            pl.BlockSpec((1, F, D), lambda b, l: (l, 0, 0)),        # W2   (bf16)
            pl.BlockSpec((1, 6, D), lambda b, l: (l, 0, 0)),        # LN/bias pack
        ],
        # Resident output block == activation slab carried across the layer axis.
        out_specs=pl.BlockSpec((R, D), lambda b, l: (b, 0)),
        scratch_shapes=[pltpu.VMEM((R, D), jnp.float32)],           # head-concat buf
        compiler_params=pltpu.CompilerParams(
            dimension_semantics=("parallel", "arbitrary"),
            vmem_limit_bytes=_vmem_limit_bytes(R, S, D, F)),
    )(x, mask, pos[:, :S, :], wqkv, bqkv,
      params["wo"], params["w1"], params["b1"], params["w2"], params["lnb"])
    return out_flat.reshape(B, S, D)


# ----------------------------------------------------------------------------
# Parameter / positional-encoding construction (deterministic, in-script)
# ----------------------------------------------------------------------------
def positional_encoding(max_len, d_model):
    pos = jnp.arange(max_len, dtype=jnp.float32)[:, None]
    i = jnp.arange(d_model, dtype=jnp.float32)[None, :]
    angle_rates = 1.0 / jnp.power(10000.0, (2.0 * jnp.floor(i / 2.0)) / d_model)
    angles = pos * angle_rates
    pe = jnp.where(jnp.mod(jnp.arange(d_model), 2) == 0,
                   jnp.sin(angles), jnp.cos(angles))
    return pe[None].astype(jnp.float32)                  # (1, max_len, d_model)


def init_params(key, num_layers, d_model, intermediate_dim):
    L, D, F = num_layers, d_model, intermediate_dim
    ks = jax.random.split(key, 4)

    def w(k, shape, scale=0.05):
        # Matmul weights in bf16: halves HBM->VMEM DMA / residency and feeds
        # the native bf16 MXU path; accumulation stays f32 in-kernel.
        return (scale * jax.random.normal(k, (L,) + shape)).astype(jnp.bfloat16)

    lnb = jnp.concatenate([
        jnp.ones((L, 1, D), jnp.float32),    # layernorm1 gamma
        jnp.zeros((L, 1, D), jnp.float32),   # layernorm1 beta
        jnp.ones((L, 1, D), jnp.float32),    # layernorm2 gamma
        jnp.zeros((L, 1, D), jnp.float32),   # layernorm2 beta
        jnp.zeros((L, 1, D), jnp.float32),   # attention output bias
        jnp.zeros((L, 1, D), jnp.float32),   # FFN second-linear bias
    ], axis=1)

    return dict(
        wqkv=w(ks[0], (D, 3 * D)),
        bqkv=jnp.zeros((L, 1, 3 * D), jnp.float32),
        wo=w(ks[1], (D, D)),
        w1=w(ks[2], (D, F)),
        b1=jnp.zeros((L, 1, F), jnp.float32),
        w2=w(ks[3], (F, D)),
        lnb=lnb,
    )


# ----------------------------------------------------------------------------
if __name__ == "__main__":
    num_layers, d_model, num_head, intermediate_dim = 2, 32, 4, 64
    max_src_len, batch, seq = 16, 2, 8

    key = jax.random.PRNGKey(0)
    kx, kp = jax.random.split(key)

    x = jax.random.normal(kx, (batch, seq, d_model), jnp.float32)   # src embeddings
    mask = jnp.zeros((batch, 1, seq), jnp.float32)                  # 1.0 = padded key
    pos = positional_encoding(max_src_len, d_model)
    params = init_params(kp, num_layers, d_model, intermediate_dim)

    out = transformer_encoder(x, mask, pos, params, num_head)
    out = jax.block_until_ready(out)
    assert out.shape == (batch, seq, d_model) and out.dtype == jnp.float32
    print("KERNEL_OK")
</pallas_src>

<mosaic_0001>
module attributes {stable_mosaic.version = 11 : i64} {
  func.func @encoder_kernel(%arg0: i32, %arg1: i32, %arg2: memref<1x8x32xf32, #tpu.memory_space<vmem>>, %arg3: memref<1x1x8xf32, #tpu.memory_space<vmem>>, %arg4: memref<1x8x32xf32, #tpu.memory_space<vmem>>, %arg5: memref<1x32x96xbf16, #tpu.memory_space<vmem>>, %arg6: memref<1x1x96xf32, #tpu.memory_space<vmem>>, %arg7: memref<1x32x32xbf16, #tpu.memory_space<vmem>>, %arg8: memref<1x32x64xbf16, #tpu.memory_space<vmem>>, %arg9: memref<1x1x64xf32, #tpu.memory_space<vmem>>, %arg10: memref<1x64x32xbf16, #tpu.memory_space<vmem>>, %arg11: memref<1x6x32xf32, #tpu.memory_space<vmem>>, %arg12: memref<8x32xf32, #tpu.memory_space<vmem>>, %arg13: memref<8x32xf32, #tpu.memory_space<vmem>>) attributes {dimension_semantics = [#tpu.dimension_semantics<parallel>, #tpu.dimension_semantics<arbitrary>], iteration_bounds = array<i64: 2, 2>, scalar_prefetch = 0 : i64, scratch_operands = 1 : i64, tpu.core_type = #tpu.core_type<tc>, window_params = [{transform_indices = @transform_0, window_bounds = array<i64: 1, 8, 32>}, {transform_indices = @transform_1, window_bounds = array<i64: 1, 1, 8>}, {pipeline_mode = #tpu.pipeline_mode<synchronous>, transform_indices = @transform_2, window_bounds = array<i64: 1, 8, 32>}, {transform_indices = @transform_3, window_bounds = array<i64: 1, 32, 96>}, {transform_indices = @transform_4, window_bounds = array<i64: 1, 1, 96>}, {transform_indices = @transform_5, window_bounds = array<i64: 1, 32, 32>}, {transform_indices = @transform_6, window_bounds = array<i64: 1, 32, 64>}, {transform_indices = @transform_7, window_bounds = array<i64: 1, 1, 64>}, {transform_indices = @transform_8, window_bounds = array<i64: 1, 64, 32>}, {transform_indices = @transform_9, window_bounds = array<i64: 1, 6, 32>}, {transform_indices = @transform_10, window_bounds = array<i64: 8, 32>}]} {
    %c0_i32 = arith.constant 0 : i32
    %0 = arith.cmpi eq, %arg1, %c0_i32 : i32
    %1 = arith.extui %0 : i1 to i32
    %c0_i32_0 = arith.constant 0 : i32
    %2 = arith.cmpi ne, %1, %c0_i32_0 : i32
    scf.if %2 {
      %c0_66 = arith.constant 0 : index
      %c0_67 = arith.constant 0 : index
      %c0_68 = arith.constant 0 : index
      %191 = vector.load %arg2[%c0_66, %c0_67, %c0_68] : memref<1x8x32xf32, #tpu.memory_space<vmem>>, vector<1x8x32xf32>
      %cst_69 = arith.constant 5.65685415 : f32
      %192 = vector.broadcast %cst_69 : f32 to vector<1x8x32xf32>
      %193 = arith.mulf %191, %192 : vector<1x8x32xf32>
      %c0_70 = arith.constant 0 : index
      %c0_71 = arith.constant 0 : index
      %c0_72 = arith.constant 0 : index
      %194 = vector.load %arg4[%c0_70, %c0_71, %c0_72] : memref<1x8x32xf32, #tpu.memory_space<vmem>>, vector<1x8x32xf32>
      %195 = vector.shape_cast %194 : vector<1x8x32xf32> to vector<8x32xf32>
      %196 = vector.shape_cast %195 : vector<8x32xf32> to vector<1x8x32xf32>
      %197 = arith.addf %193, %196 : vector<1x8x32xf32>
      %198 = vector.shape_cast %197 : vector<1x8x32xf32> to vector<8x32xf32>
      %c0_73 = arith.constant 0 : index
      %c0_74 = arith.constant 0 : index
      %199 = vector.load %arg12[%c0_73, %c0_74] : memref<8x32xf32, #tpu.memory_space<vmem>>, vector<8x32xf32>
      tpu.vector_store %arg12[%c0_73, %c0_74], %198 {strides = array<i32>} : memref<8x32xf32, #tpu.memory_space<vmem>>, vector<8x32xf32>,
    } else {
    }
    %c0 = arith.constant 0 : index
    %c0_1 = arith.constant 0 : index
    %3 = vector.load %arg12[%c0, %c0_1] : memref<8x32xf32, #tpu.memory_space<vmem>>, vector<8x32xf32>
    %c0_2 = arith.constant 0 : index
    %c0_3 = arith.constant 0 : index
    %c0_4 = arith.constant 0 : index
    %4 = vector.load %arg3[%c0_2, %c0_3, %c0_4] : memref<1x1x8xf32, #tpu.memory_space<vmem>>, vector<1x1x8xf32>
    %cst = arith.constant -1.000000e+09 : f32
    %5 = vector.broadcast %cst : f32 to vector<1x1x8xf32>
    %6 = arith.mulf %4, %5 : vector<1x1x8xf32>
    %7 = vector.shape_cast %6 : vector<1x1x8xf32> to vector<1x1x8xf32>
    %8 = vector.broadcast %7 : vector<1x1x8xf32> to vector<1x8x8xf32>
    %c0_5 = arith.constant 0 : index
    %c0_6 = arith.constant 0 : index
    %c0_7 = arith.constant 0 : index
    %9 = vector.load %arg5[%c0_5, %c0_6, %c0_7] : memref<1x32x96xbf16, #tpu.memory_space<vmem>>, vector<1x32x96xbf16>
    %10 = vector.shape_cast %9 : vector<1x32x96xbf16> to vector<32x96xbf16>
    %c0_8 = arith.constant 0 : index
    %c0_9 = arith.constant 0 : index
    %c0_10 = arith.constant 0 : index
    %11 = vector.load %arg7[%c0_8, %c0_9, %c0_10] : memref<1x32x32xbf16, #tpu.memory_space<vmem>>, vector<1x32x32xbf16>
    %12 = vector.shape_cast %11 : vector<1x32x32xbf16> to vector<32x32xbf16>
    %c0_11 = arith.constant 0 : index
    %c0_12 = arith.constant 0 : index
    %c0_13 = arith.constant 0 : index
    %13 = vector.load %arg8[%c0_11, %c0_12, %c0_13] : memref<1x32x64xbf16, #tpu.memory_space<vmem>>, vector<1x32x64xbf16>
    %14 = vector.shape_cast %13 : vector<1x32x64xbf16> to vector<32x64xbf16>
    %c0_14 = arith.constant 0 : index
    %c0_15 = arith.constant 0 : index
    %c0_16 = arith.constant 0 : index
    %15 = vector.load %arg10[%c0_14, %c0_15, %c0_16] : memref<1x64x32xbf16, #tpu.memory_space<vmem>>, vector<1x64x32xbf16>
    %16 = vector.shape_cast %15 : vector<1x64x32xbf16> to vector<64x32xbf16>
    %c0_17 = arith.constant 0 : index
    %c0_18 = arith.constant 0 : index
    %c0_19 = arith.constant 0 : index
    %17 = vector.load %arg6[%c0_17, %c0_18, %c0_19] : memref<1x1x96xf32, #tpu.memory_space<vmem>>, vector<1x1x96xf32>
    %18 = vector.shape_cast %17 : vector<1x1x96xf32> to vector<1x96xf32>
    %c0_20 = arith.constant 0 : index
    %c0_21 = arith.constant 0 : index
    %c0_22 = arith.constant 0 : index
    %19 = vector.load %arg9[%c0_20, %c0_21, %c0_22] : memref<1x1x64xf32, #tpu.memory_space<vmem>>, vector<1x1x64xf32>
    %20 = vector.shape_cast %19 : vector<1x1x64xf32> to vector<1x64xf32>
    %c0_23 = arith.constant 0 : index
    %c0_24 = arith.constant 0 : index
    %c0_25 = arith.constant 0 : index
    %21 = vector.load %arg11[%c0_23, %c0_24, %c0_25] : memref<1x6x32xf32, #tpu.memory_space<vmem>>, vector<1x6x32xf32>
    %22 = vector.shape_cast %21 : vector<1x6x32xf32> to vector<6x32xf32>
    %23 = vector.extract_strided_slice %22 {offsets = [0, 0], sizes = [1, 32], strides = [1, 1]} : vector<6x32xf32> to vector<1x32xf32>
    %24 = vector.extract_strided_slice %22 {offsets = [1, 0], sizes = [1, 32], strides = [1, 1]} : vector<6x32xf32> to vector<1x32xf32>
    %25 = vector.extract_strided_slice %22 {offsets = [2, 0], sizes = [1, 32], strides = [1, 1]} : vector<6x32xf32> to vector<1x32xf32>
    %26 = vector.extract_strided_slice %22 {offsets = [3, 0], sizes = [1, 32], strides = [1, 1]} : vector<6x32xf32> to vector<1x32xf32>
    %27 = vector.extract_strided_slice %22 {offsets = [4, 0], sizes = [1, 32], strides = [1, 1]} : vector<6x32xf32> to vector<1x32xf32>
    %28 = vector.extract_strided_slice %22 {offsets = [5, 0], sizes = [1, 32], strides = [1, 1]} : vector<6x32xf32> to vector<1x32xf32>
    %29 = arith.truncf %3 : vector<8x32xf32> to vector<8x32xbf16>
    %cst_26 = arith.constant dense<0.000000e+00> : vector<8x96xf32>
    %30 = tpu.matmul %29, %10, %cst_26 {dimension_numbers = #tpu.dot_dimension_numbers<[1], [0], [0], [1], [0, 0, 1, 1], [], []>} : vector<8x32xbf16>, vector<32x96xbf16>, vector<8x96xf32> -> vector<8x96xf32>
    %31 = vector.broadcast %18 : vector<1x96xf32> to vector<8x96xf32>
    %32 = arith.addf %30, %31 : vector<8x96xf32>
    %33 = vector.extract_strided_slice %32 {offsets = [0, 0], sizes = [8, 8], strides = [1, 1]} : vector<8x96xf32> to vector<8x8xf32>
    %34 = vector.shape_cast %33 : vector<8x8xf32> to vector<1x8x8xf32>
    %35 = arith.truncf %34 : vector<1x8x8xf32> to vector<1x8x8xbf16>
    %36 = vector.extract_strided_slice %32 {offsets = [0, 32], sizes = [8, 8], strides = [1, 1]} : vector<8x96xf32> to vector<8x8xf32>
    %37 = vector.shape_cast %36 : vector<8x8xf32> to vector<1x8x8xf32>
    %38 = arith.truncf %37 : vector<1x8x8xf32> to vector<1x8x8xbf16>
    %39 = vector.extract_strided_slice %32 {offsets = [0, 64], sizes = [8, 8], strides = [1, 1]} : vector<8x96xf32> to vector<8x8xf32>
    %40 = vector.shape_cast %39 : vector<8x8xf32> to vector<1x8x8xf32>
    %41 = arith.truncf %40 : vector<1x8x8xf32> to vector<1x8x8xbf16>
    "tpu.trace_start"() <{level = 10 : i32, message = "bqd,bkd->bqk"}> : () -> ()
    %cst_27 = arith.constant dense<0.000000e+00> : vector<1x8x8xf32>
    %42 = tpu.matmul %35, %38, %cst_27 {dimension_numbers = #tpu.dot_dimension_numbers<[2], [2], [1], [1], [0, 0, 0, 1, 1, 1], [0], [0]>} : vector<1x8x8xbf16>, vector<1x8x8xbf16>, vector<1x8x8xf32> -> vector<1x8x8xf32>
    "tpu.trace_stop"() : () -> ()
    %43 = arith.addf %42, %8 : vector<1x8x8xf32>
    %cst_28 = arith.constant dense<0xFF800000> : vector<1x8xf32>
    %44 = vector.multi_reduction <maximumf>, %43, %cst_28 [2] : vector<1x8x8xf32> to vector<1x8xf32>
    %45 = vector.shape_cast %44 : vector<1x8xf32> to vector<1x8x1xf32>
    %46 = vector.broadcast %45 : vector<1x8x1xf32> to vector<1x8x8xf32>
    %47 = arith.subf %43, %46 : vector<1x8x8xf32>
    %48 = math.exp %47 : vector<1x8x8xf32>
    %cst_29 = arith.constant dense<0.000000e+00> : vector<1x8xf32>
    %49 = vector.multi_reduction <add>, %48, %cst_29 [2] : vector<1x8x8xf32> to vector<1x8xf32>
    %50 = vector.shape_cast %49 : vector<1x8xf32> to vector<1x8x1xf32>
    %51 = vector.broadcast %50 : vector<1x8x1xf32> to vector<1x8x8xf32>
    %52 = arith.divf %48, %51 : vector<1x8x8xf32>
    %53 = arith.truncf %52 : vector<1x8x8xf32> to vector<1x8x8xbf16>
    "tpu.trace_start"() <{level = 10 : i32, message = "bqk,bkd->bqd"}> : () -> ()
    %cst_30 = arith.constant dense<0.000000e+00> : vector<1x8x8xf32>
    %54 = tpu.matmul %53, %41, %cst_30 {dimension_numbers = #tpu.dot_dimension_numbers<[2], [1], [1], [2], [0, 0, 0, 1, 1, 2], [0], [0]>} : vector<1x8x8xbf16>, vector<1x8x8xbf16>, vector<1x8x8xf32> -> vector<1x8x8xf32>
    "tpu.trace_stop"() : () -> ()
    %55 = vector.shape_cast %54 : vector<1x8x8xf32> to vector<8x8xf32>
    %c0_31 = arith.constant 0 : index
    %c0_32 = arith.constant 0 : index
    %56 = vector.load %arg13[%c0_31, %c0_32] : memref<8x32xf32, #tpu.memory_space<vmem>>, vector<8x8xf32>
    tpu.vector_store %arg13[%c0_31, %c0_32], %55 {strides = array<i32>} : memref<8x32xf32, #tpu.memory_space<vmem>>, vector<8x8xf32>,
    %57 = vector.extract_strided_slice %32 {offsets = [0, 8], sizes = [8, 8], strides = [1, 1]} : vector<8x96xf32> to vector<8x8xf32>
    %58 = vector.shape_cast %57 : vector<8x8xf32> to vector<1x8x8xf32>
    %59 = arith.truncf %58 : vector<1x8x8xf32> to vector<1x8x8xbf16>
    %60 = vector.extract_strided_slice %32 {offsets = [0, 40], sizes = [8, 8], strides = [1, 1]} : vector<8x96xf32> to vector<8x8xf32>
    %61 = vector.shape_cast %60 : vector<8x8xf32> to vector<1x8x8xf32>
    %62 = arith.truncf %61 : vector<1x8x8xf32> to vector<1x8x8xbf16>
    %63 = vector.extract_strided_slice %32 {offsets = [0, 72], sizes = [8, 8], strides = [1, 1]} : vector<8x96xf32> to vector<8x8xf32>
    %64 = vector.shape_cast %63 : vector<8x8xf32> to vector<1x8x8xf32>
    %65 = arith.truncf %64 : vector<1x8x8xf32> to vector<1x8x8xbf16>
    "tpu.trace_start"() <{level = 10 : i32, message = "bqd,bkd->bqk"}> : () -> ()
    %cst_33 = arith.constant dense<0.000000e+00> : vector<1x8x8xf32>
    %66 = tpu.matmul %59, %62, %cst_33 {dimension_numbers = #tpu.dot_dimension_numbers<[2], [2], [1], [1], [0, 0, 0, 1, 1, 1], [0], [0]>} : vector<1x8x8xbf16>, vector<1x8x8xbf16>, vector<1x8x8xf32> -> vector<1x8x8xf32>
    "tpu.trace_stop"() : () -> ()
    %67 = arith.addf %66, %8 : vector<1x8x8xf32>
    %cst_34 = arith.constant dense<0xFF800000> : vector<1x8xf32>
    %68 = vector.multi_reduction <maximumf>, %67, %cst_34 [2] : vector<1x8x8xf32> to vector<1x8xf32>
    %69 = vector.shape_cast %68 : vector<1x8xf32> to vector<1x8x1xf32>
    %70 = vector.broadcast %69 : vector<1x8x1xf32> to vector<1x8x8xf32>
    %71 = arith.subf %67, %70 : vector<1x8x8xf32>
    %72 = math.exp %71 : vector<1x8x8xf32>
    %cst_35 = arith.constant dense<0.000000e+00> : vector<1x8xf32>
    %73 = vector.multi_reduction <add>, %72, %cst_35 [2] : vector<1x8x8xf32> to vector<1x8xf32>
    %74 = vector.shape_cast %73 : vector<1x8xf32> to vector<1x8x1xf32>
    %75 = vector.broadcast %74 : vector<1x8x1xf32> to vector<1x8x8xf32>
    %76 = arith.divf %72, %75 : vector<1x8x8xf32>
    %77 = arith.truncf %76 : vector<1x8x8xf32> to vector<1x8x8xbf16>
    "tpu.trace_start"() <{level = 10 : i32, message = "bqk,bkd->bqd"}> : () -> ()
    %cst_36 = arith.constant dense<0.000000e+00> : vector<1x8x8xf32>
    %78 = tpu.matmul %77, %65, %cst_36 {dimension_numbers = #tpu.dot_dimension_numbers<[2], [1], [1], [2], [0, 0, 0, 1, 1, 2], [0], [0]>} : vector<1x8x8xbf16>, vector<1x8x8xbf16>, vector<1x8x8xf32> -> vector<1x8x8xf32>
    "tpu.trace_stop"() : () -> ()
    %79 = vector.shape_cast %78 : vector<1x8x8xf32> to vector<8x8xf32>
    %c0_37 = arith.constant 0 : index
    %c8 = arith.constant 8 : index
    %80 = vector.load %arg13[%c0_37, %c8] : memref<8x32xf32, #tpu.memory_space<vmem>>, vector<8x8xf32>
    tpu.vector_store %arg13[%c0_37, %c8], %79 {strides = array<i32>} : memref<8x32xf32, #tpu.memory_space<vmem>>, vector<8x8xf32>,
    %81 = vector.extract_strided_slice %32 {offsets = [0, 16], sizes = [8, 8], strides = [1, 1]} : vector<8x96xf32> to vector<8x8xf32>
    %82 = vector.shape_cast %81 : vector<8x8xf32> to vector<1x8x8xf32>
    %83 = arith.truncf %82 : vector<1x8x8xf32> to vector<1x8x8xbf16>
    %84 = vector.extract_strided_slice %32 {offsets = [0, 48], sizes = [8, 8], strides = [1, 1]} : vector<8x96xf32> to vector<8x8xf32>
    %85 = vector.shape_cast %84 : vector<8x8xf32> to vector<1x8x8xf32>
    %86 = arith.truncf %85 : vector<1x8x8xf32> to vector<1x8x8xbf16>
    %87 = vector.extract_strided_slice %32 {offsets = [0, 80], sizes = [8, 8], strides = [1, 1]} : vector<8x96xf32> to vector<8x8xf32>
    %88 = vector.shape_cast %87 : vector<8x8xf32> to vector<1x8x8xf32>
    %89 = arith.truncf %88 : vector<1x8x8xf32> to vector<1x8x8xbf16>
    "tpu.trace_start"() <{level = 10 : i32, message = "bqd,bkd->bqk"}> : () -> ()
    %cst_38 = arith.constant dense<0.000000e+00> : vector<1x8x8xf32>
    %90 = tpu.matmul %83, %86, %cst_38 {dimension_numbers = #tpu.dot_dimension_numbers<[2], [2], [1], [1], [0, 0, 0, 1, 1, 1], [0], [0]>} : vector<1x8x8xbf16>, vector<1x8x8xbf16>, vector<1x8x8xf32> -> vector<1x8x8xf32>
    "tpu.trace_stop"() : () -> ()
    %91 = arith.addf %90, %8 : vector<1x8x8xf32>
    %cst_39 = arith.constant dense<0xFF800000> : vector<1x8xf32>
    %92 = vector.multi_reduction <maximumf>, %91, %cst_39 [2] : vector<1x8x8xf32> to vector<1x8xf32>
    %93 = vector.shape_cast %92 : vector<1x8xf32> to vector<1x8x1xf32>
    %94 = vector.broadcast %93 : vector<1x8x1xf32> to vector<1x8x8xf32>
    %95 = arith.subf %91, %94 : vector<1x8x8xf32>
    %96 = math.exp %95 : vector<1x8x8xf32>
    %cst_40 = arith.constant dense<0.000000e+00> : vector<1x8xf32>
    %97 = vector.multi_reduction <add>, %96, %cst_40 [2] : vector<1x8x8xf32> to vector<1x8xf32>
    %98 = vector.shape_cast %97 : vector<1x8xf32> to vector<1x8x1xf32>
    %99 = vector.broadcast %98 : vector<1x8x1xf32> to vector<1x8x8xf32>
    %100 = arith.divf %96, %99 : vector<1x8x8xf32>
    %101 = arith.truncf %100 : vector<1x8x8xf32> to vector<1x8x8xbf16>
    "tpu.trace_start"() <{level = 10 : i32, message = "bqk,bkd->bqd"}> : () -> ()
    %cst_41 = arith.constant dense<0.000000e+00> : vector<1x8x8xf32>
    %102 = tpu.matmul %101, %89, %cst_41 {dimension_numbers = #tpu.dot_dimension_numbers<[2], [1], [1], [2], [0, 0, 0, 1, 1, 2], [0], [0]>} : vector<1x8x8xbf16>, vector<1x8x8xbf16>, vector<1x8x8xf32> -> vector<1x8x8xf32>
    "tpu.trace_stop"() : () -> ()
    %103 = vector.shape_cast %102 : vector<1x8x8xf32> to vector<8x8xf32>
    %c0_42 = arith.constant 0 : index
    %c16 = arith.constant 16 : index
    %104 = vector.load %arg13[%c0_42, %c16] : memref<8x32xf32, #tpu.memory_space<vmem>>, vector<8x8xf32>
    tpu.vector_store %arg13[%c0_42, %c16], %103 {strides = array<i32>} : memref<8x32xf32, #tpu.memory_space<vmem>>, vector<8x8xf32>,
    %105 = vector.extract_strided_slice %32 {offsets = [0, 24], sizes = [8, 8], strides = [1, 1]} : vector<8x96xf32> to vector<8x8xf32>
    %106 = vector.shape_cast %105 : vector<8x8xf32> to vector<1x8x8xf32>
    %107 = arith.truncf %106 : vector<1x8x8xf32> to vector<1x8x8xbf16>
    %108 = vector.extract_strided_slice %32 {offsets = [0, 56], sizes = [8, 8], strides = [1, 1]} : vector<8x96xf32> to vector<8x8xf32>
    %109 = vector.shape_cast %108 : vector<8x8xf32> to vector<1x8x8xf32>
    %110 = arith.truncf %109 : vector<1x8x8xf32> to vector<1x8x8xbf16>
    %111 = vector.extract_strided_slice %32 {offsets = [0, 88], sizes = [8, 8], strides = [1, 1]} : vector<8x96xf32> to vector<8x8xf32>
    %112 = vector.shape_cast %111 : vector<8x8xf32> to vector<1x8x8xf32>
    %113 = arith.truncf %112 : vector<1x8x8xf32> to vector<1x8x8xbf16>
    "tpu.trace_start"() <{level = 10 : i32, message = "bqd,bkd->bqk"}> : () -> ()
    %cst_43 = arith.constant dense<0.000000e+00> : vector<1x8x8xf32>
    %114 = tpu.matmul %107, %110, %cst_43 {dimension_numbers = #tpu.dot_dimension_numbers<[2], [2], [1], [1], [0, 0, 0, 1, 1, 1], [0], [0]>} : vector<1x8x8xbf16>, vector<1x8x8xbf16>, vector<1x8x8xf32> -> vector<1x8x8xf32>
    "tpu.trace_stop"() : () -> ()
    %115 = arith.addf %114, %8 : vector<1x8x8xf32>
    %cst_44 = arith.constant dense<0xFF800000> : vector<1x8xf32>
    %116 = vector.multi_reduction <maximumf>, %115, %cst_44 [2] : vector<1x8x8xf32> to vector<1x8xf32>
    %117 = vector.shape_cast %116 : vector<1x8xf32> to vector<1x8x1xf32>
    %118 = vector.broadcast %117 : vector<1x8x1xf32> to vector<1x8x8xf32>
    %119 = arith.subf %115, %118 : vector<1x8x8xf32>
    %120 = math.exp %119 : vector<1x8x8xf32>
    %cst_45 = arith.constant dense<0.000000e+00> : vector<1x8xf32>
    %121 = vector.multi_reduction <add>, %120, %cst_45 [2] : vector<1x8x8xf32> to vector<1x8xf32>
    %122 = vector.shape_cast %121 : vector<1x8xf32> to vector<1x8x1xf32>
    %123 = vector.broadcast %122 : vector<1x8x1xf32> to vector<1x8x8xf32>
    %124 = arith.divf %120, %123 : vector<1x8x8xf32>
    %125 = arith.truncf %124 : vector<1x8x8xf32> to vector<1x8x8xbf16>
    "tpu.trace_start"() <{level = 10 : i32, message = "bqk,bkd->bqd"}> : () -> ()
    %cst_46 = arith.constant dense<0.000000e+00> : vector<1x8x8xf32>
    %126 = tpu.matmul %125, %113, %cst_46 {dimension_numbers = #tpu.dot_dimension_numbers<[2], [1], [1], [2], [0, 0, 0, 1, 1, 2], [0], [0]>} : vector<1x8x8xbf16>, vector<1x8x8xbf16>, vector<1x8x8xf32> -> vector<1x8x8xf32>
    "tpu.trace_stop"() : () -> ()
    %127 = vector.shape_cast %126 : vector<1x8x8xf32> to vector<8x8xf32>
    %c0_47 = arith.constant 0 : index
    %c24 = arith.constant 24 : index
    %128 = vector.load %arg13[%c0_47, %c24] : memref<8x32xf32, #tpu.memory_space<vmem>>, vector<8x8xf32>
    tpu.vector_store %arg13[%c0_47, %c24], %127 {strides = array<i32>} : memref<8x32xf32, #tpu.memory_space<vmem>>, vector<8x8xf32>,
    %c0_48 = arith.constant 0 : index
    %c0_49 = arith.constant 0 : index
    %129 = vector.load %arg13[%c0_48, %c0_49] : memref<8x32xf32, #tpu.memory_space<vmem>>, vector<8x32xf32>
    %130 = arith.truncf %129 : vector<8x32xf32> to vector<8x32xbf16>
    %cst_50 = arith.constant dense<0.000000e+00> : vector<8x32xf32>
    %131 = tpu.matmul %130, %12, %cst_50 {dimension_numbers = #tpu.dot_dimension_numbers<[1], [0], [0], [1], [0, 0, 1, 1], [], []>} : vector<8x32xbf16>, vector<32x32xbf16>, vector<8x32xf32> -> vector<8x32xf32>
    %132 = vector.broadcast %27 : vector<1x32xf32> to vector<8x32xf32>
    %133 = arith.addf %131, %132 : vector<8x32xf32>
    %134 = arith.addf %3, %133 : vector<8x32xf32>
    %cst_51 = arith.constant dense<0.000000e+00> : vector<8xf32>
    %135 = vector.multi_reduction <add>, %134, %cst_51 [1] : vector<8x32xf32> to vector<8xf32>
    %136 = vector.shape_cast %135 : vector<8xf32> to vector<8x1xf32>
    %cst_52 = arith.constant 3.200000e+01 : f32
    %137 = vector.broadcast %cst_52 : f32 to vector<8x1xf32>
    %138 = arith.divf %136, %137 : vector<8x1xf32>
    %139 = vector.broadcast %138 : vector<8x1xf32> to vector<8x32xf32>
    %140 = arith.subf %134, %139 : vector<8x32xf32>
    %141 = arith.mulf %140, %140 : vector<8x32xf32>
    %cst_53 = arith.constant dense<0.000000e+00> : vector<8xf32>
    %142 = vector.multi_reduction <add>, %141, %cst_53 [1] : vector<8x32xf32> to vector<8xf32>
    %143 = vector.shape_cast %142 : vector<8xf32> to vector<8x1xf32>
    %cst_54 = arith.constant 3.200000e+01 : f32
    %144 = vector.broadcast %cst_54 : f32 to vector<8x1xf32>
    %145 = arith.divf %143, %144 : vector<8x1xf32>
    %146 = vector.broadcast %138 : vector<8x1xf32> to vector<8x32xf32>
    %147 = arith.subf %134, %146 : vector<8x32xf32>
    %cst_55 = arith.constant 9.99999997E-7 : f32
    %148 = vector.broadcast %cst_55 : f32 to vector<8x1xf32>
    %149 = arith.addf %145, %148 : vector<8x1xf32>
    %150 = math.rsqrt %149 : vector<8x1xf32>
    %151 = vector.broadcast %150 : vector<8x1xf32> to vector<8x32xf32>
    %152 = arith.mulf %147, %151 : vector<8x32xf32>
    %153 = vector.broadcast %23 : vector<1x32xf32> to vector<8x32xf32>
    %154 = arith.mulf %152, %153 : vector<8x32xf32>
    %155 = vector.broadcast %24 : vector<1x32xf32> to vector<8x32xf32>
    %156 = arith.addf %154, %155 : vector<8x32xf32>
    %157 = arith.truncf %156 : vector<8x32xf32> to vector<8x32xbf16>
    %cst_56 = arith.constant dense<0.000000e+00> : vector<8x64xf32>
    %158 = tpu.matmul %157, %14, %cst_56 {dimension_numbers = #tpu.dot_dimension_numbers<[1], [0], [0], [1], [0, 0, 1, 1], [], []>} : vector<8x32xbf16>, vector<32x64xbf16>, vector<8x64xf32> -> vector<8x64xf32>
    %159 = vector.broadcast %20 : vector<1x64xf32> to vector<8x64xf32>
    %160 = arith.addf %158, %159 : vector<8x64xf32>
    %cst_57 = arith.constant 0.000000e+00 : f32
    %161 = vector.broadcast %cst_57 : f32 to vector<8x64xf32>
    %162 = arith.maximumf %160, %161 : vector<8x64xf32>
    %163 = arith.truncf %162 : vector<8x64xf32> to vector<8x64xbf16>
    %cst_58 = arith.constant dense<0.000000e+00> : vector<8x32xf32>
    %164 = tpu.matmul %163, %16, %cst_58 {dimension_numbers = #tpu.dot_dimension_numbers<[1], [0], [0], [1], [0, 0, 1, 1], [], []>} : vector<8x64xbf16>, vector<64x32xbf16>, vector<8x32xf32> -> vector<8x32xf32>
    %165 = vector.broadcast %28 : vector<1x32xf32> to vector<8x32xf32>
    %166 = arith.addf %164, %165 : vector<8x32xf32>
    %167 = arith.addf %156, %166 : vector<8x32xf32>
    %cst_59 = arith.constant dense<0.000000e+00> : vector<8xf32>
    %168 = vector.multi_reduction <add>, %167, %cst_59 [1] : vector<8x32xf32> to vector<8xf32>
    %169 = vector.shape_cast %168 : vector<8xf32> to vector<8x1xf32>
    %cst_60 = arith.constant 3.200000e+01 : f32
    %170 = vector.broadcast %cst_60 : f32 to vector<8x1xf32>
    %171 = arith.divf %169, %170 : vector<8x1xf32>
    %172 = vector.broadcast %171 : vector<8x1xf32> to vector<8x32xf32>
    %173 = arith.subf %167, %172 : vector<8x32xf32>
    %174 = arith.mulf %173, %173 : vector<8x32xf32>
    %cst_61 = arith.constant dense<0.000000e+00> : vector<8xf32>
    %175 = vector.multi_reduction <add>, %174, %cst_61 [1] : vector<8x32xf32> to vector<8xf32>
    %176 = vector.shape_cast %175 : vector<8xf32> to vector<8x1xf32>
    %cst_62 = arith.constant 3.200000e+01 : f32
    %177 = vector.broadcast %cst_62 : f32 to vector<8x1xf32>
    %178 = arith.divf %176, %177 : vector<8x1xf32>
    %179 = vector.broadcast %171 : vector<8x1xf32> to vector<8x32xf32>
    %180 = arith.subf %167, %179 : vector<8x32xf32>
    %cst_63 = arith.constant 9.99999997E-7 : f32
    %181 = vector.broadcast %cst_63 : f32 to vector<8x1xf32>
    %182 = arith.addf %178, %181 : vector<8x1xf32>
    %183 = math.rsqrt %182 : vector<8x1xf32>
    %184 = vector.broadcast %183 : vector<8x1xf32> to vector<8x32xf32>
    %185 = arith.mulf %180, %184 : vector<8x32xf32>
    %186 = vector.broadcast %25 : vector<1x32xf32> to vector<8x32xf32>
    %187 = arith.mulf %185, %186 : vector<8x32xf32>
    %188 = vector.broadcast %26 : vector<1x32xf32> to vector<8x32xf32>
    %189 = arith.addf %187, %188 : vector<8x32xf32>
    %c0_64 = arith.constant 0 : index
    %c0_65 = arith.constant 0 : index
    %190 = vector.load %arg12[%c0_64, %c0_65] : memref<8x32xf32, #tpu.memory_space<vmem>>, vector<8x32xf32>
    tpu.vector_store %arg12[%c0_64, %c0_65], %189 {strides = array<i32>} : memref<8x32xf32, #tpu.memory_space<vmem>>, vector<8x32xf32>,
    return
  }
  func.func @transform_0(%arg0: i32, %arg1: i32) -> (i32, i32, i32) {
    %c0_i32 = arith.constant 0 : i32
    %c0_i32_0 = arith.constant 0 : i32
    %c0_i32_1 = arith.constant 0 : i32
    return %arg0, %c0_i32, %c0_i32_0 : i32, i32, i32
  }
  func.func @transform_1(%arg0: i32, %arg1: i32) -> (i32, i32, i32) {
    %c0_i32 = arith.constant 0 : i32
    %c0_i32_0 = arith.constant 0 : i32
    %c0_i32_1 = arith.constant 0 : i32
    return %arg0, %c0_i32, %c0_i32_0 : i32, i32, i32
  }
  func.func @transform_2(%arg0: i32, %arg1: i32) -> (i32, i32, i32) {
    %c0_i32 = arith.constant 0 : i32
    %c0_i32_0 = arith.constant 0 : i32
    %c0_i32_1 = arith.constant 0 : i32
    %c0_i32_2 = arith.constant 0 : i32
    return %c0_i32, %c0_i32_0, %c0_i32_1 : i32, i32, i32
  }
  func.func @transform_3(%arg0: i32, %arg1: i32) -> (i32, i32, i32) {
    %c0_i32 = arith.constant 0 : i32
    %c0_i32_0 = arith.constant 0 : i32
    %c0_i32_1 = arith.constant 0 : i32
    return %arg1, %c0_i32, %c0_i32_0 : i32, i32, i32
  }
  func.func @transform_4(%arg0: i32, %arg1: i32) -> (i32, i32, i32) {
    %c0_i32 = arith.constant 0 : i32
    %c0_i32_0 = arith.constant 0 : i32
    %c0_i32_1 = arith.constant 0 : i32
    return %arg1, %c0_i32, %c0_i32_0 : i32, i32, i32
  }
  func.func @transform_5(%arg0: i32, %arg1: i32) -> (i32, i32, i32) {
    %c0_i32 = arith.constant 0 : i32
    %c0_i32_0 = arith.constant 0 : i32
    %c0_i32_1 = arith.constant 0 : i32
    return %arg1, %c0_i32, %c0_i32_0 : i32, i32, i32
  }
  func.func @transform_6(%arg0: i32, %arg1: i32) -> (i32, i32, i32) {
    %c0_i32 = arith.constant 0 : i32
    %c0_i32_0 = arith.constant 0 : i32
    %c0_i32_1 = arith.constant 0 : i32
    return %arg1, %c0_i32, %c0_i32_0 : i32, i32, i32
  }
  func.func @transform_7(%arg0: i32, %arg1: i32) -> (i32, i32, i32) {
    %c0_i32 = arith.constant 0 : i32
    %c0_i32_0 = arith.constant 0 : i32
    %c0_i32_1 = arith.constant 0 : i32
    return %arg1, %c0_i32, %c0_i32_0 : i32, i32, i32
  }
  func.func @transform_8(%arg0: i32, %arg1: i32) -> (i32, i32, i32) {
    %c0_i32 = arith.constant 0 : i32
    %c0_i32_0 = arith.constant 0 : i32
    %c0_i32_1 = arith.constant 0 : i32
    return %arg1, %c0_i32, %c0_i32_0 : i32, i32, i32
  }
  func.func @transform_9(%arg0: i32, %arg1: i32) -> (i32, i32, i32) {
    %c0_i32 = arith.constant 0 : i32
    %c0_i32_0 = arith.constant 0 : i32
    %c0_i32_1 = arith.constant 0 : i32
    return %arg1, %c0_i32, %c0_i32_0 : i32, i32, i32
  }
  func.func @transform_10(%arg0: i32, %arg1: i32) -> (i32, i32) {
    %c0_i32 = arith.constant 0 : i32
    %c0_i32_0 = arith.constant 0 : i32
    return %arg0, %c0_i32 : i32, i32
  }
}

</mosaic_0001>

<llo_original>
// kernel: tpu_custom_call.1
$region0: #{tpu_custom_call.1}
  #allocation0 [shape = 'u32[]', space=smem, size = 0x4, offset = 0x4, fixed_abs, tag = 'smem constant byte address 0x4 - core index']
  #allocation1 [shape = 'u32[144,128]{1,0:T(1,128)}', space=vmem, size = 0x12000, scoped, tag = 'internal scratch']
  #allocation2 [shape = 'f32[8,32]{1,0:T(8,128)}', space=vmem, size = 0x1000, scoped, tag = 'scratch operand']
  %s0 = inlined_call_operand.vmem [shape: f32[2,8,32], index: 0, kind: input, shape index: {}]
  %s1 = inlined_call_operand.vmem [shape: f32[2,1,8], index: 1, kind: input, shape index: {}]
  %s2 = inlined_call_operand.hbm [shape: f32[1,8,32], index: 2, kind: input, shape index: {}]
  %s3 = inlined_call_operand.vmem [shape: bf16[2,32,96], index: 3, kind: input, shape index: {}]
  %s4 = inlined_call_operand.hbm [shape: f32[2,1,96], index: 4, kind: input, shape index: {}]
  %s5 = inlined_call_operand.vmem [shape: bf16[2,32,32], index: 5, kind: input, shape index: {}]
  %s6 = inlined_call_operand.vmem [shape: bf16[2,32,64], index: 6, kind: input, shape index: {}]
  %s7 = inlined_call_operand.hbm [shape: f32[2,1,64], index: 7, kind: input, shape index: {}]
  %s8 = inlined_call_operand.vmem [shape: bf16[2,64,32], index: 8, kind: input, shape index: {}]
  %s9 = inlined_call_operand.vmem [shape: f32[2,6,32], index: 9, kind: input, shape index: {}]
  %s10 = inlined_call_operand.hbm [shape: f32[16,32], index: 10, kind: output, shape index: {}]
  %s11 = sld [smem:[#allocation0]]
  $region89: #{tpu_custom_call.1} parent=0
    _
  %s13 = ssub.s32 1, %s11
  %s14 = scalar_select 0, %s13, %s11
  $region1: #{tpu_custom_call.1} parent=0
    #allocation3 [shape = 'u8[4096]{0}', space=vmem, size = 0x1000, scoped, tag = 'input window, operand 2, single buffered']
    #allocation4 [shape = 's32[2]{0}', space=sflag, size = 0x8, scoped, tag = 'scoped memory for tpu_custom_call.1']
    #allocation5 [shape = 's32[2]{0}', space=sflag, size = 0x8, scoped, tag = 'scoped memory for tpu_custom_call.1']
    #allocation6 [shape = 'u8[1024]{0}', space=vmem, size = 0x400, scoped, tag = 'input window, operand 4']
    #allocation7 [shape = 's32[2]{0}', space=sflag, size = 0x8, scoped, tag = 'scoped memory for tpu_custom_call.1']
    #allocation8 [shape = 'u8[1024]{0}', space=vmem, size = 0x400, scoped, tag = 'input window, operand 7']
    #allocation9 [shape = 'u8[8192]{0}', space=vmem, size = 0x2000, scoped, tag = 'output window, operand 0']
    %15 = vsyncpa [#allocation4], 0
    %16 = vsyncpa [#allocation7], 0
    %s17 = scalar_lea.sflag [#allocation7], 1
    %18 = vsyncpa %s17, 0
    %19 = vsyncpa [#allocation5], 0
    %s20 = scalar_lea.sflag [#allocation5], 1
    %21 = vsyncpa %s20, 0
    loop: start=0, step=1, limit=6
    $region2: #{tpu_custom_call.1} parent=1 // loop_pre_header
      _
    $region3: #{tpu_custom_call.1} parent=1 // loop_header
      %s23 = sphi 0, %s27
      %p24 = scmp.ge.s32.totalorder %s23, 6
      %s30 = sphi 0, %s42
      %s31 = sphi 0, %s38
      %s32 = sphi 0, %s30
      %s33 = sphi 0, %s31
      %s34 = sphi 0, %s32
      %s35 = sphi 0, %s33
      %s45 = sphi 0, %s47
      %s48 = sphi 0, %s45
      %s49 = sphi 0, %s48
      %s65 = sphi 0, %s49
      %s71 = sphi 0, %s73
      %s74 = sphi 0, %s71
      %s75 = sphi 0, %s74
      %s91 = sphi 0, %s75
      %s95 = sphi 0, %s95
      %s97 = sphi 0, %s95
      %s98 = sphi 0, %s97
      %s112 = sphi 0, %s98
      %s118 = sphi 0, %s120
      %s121 = sphi 0, %s118
      %s122 = sphi 0, %s121
      %s138 = sphi 0, %s122
      %s144 = sphi 0, %s146
      %s147 = sphi 0, %s144
      %s148 = sphi 0, %s147
      %s164 = sphi 0, %s148
      %s170 = sphi 0, %s172
      %s173 = sphi 0, %s170
      %s174 = sphi 0, %s173
      %s190 = sphi 0, %s174
      %s196 = sphi 0, %s198
      %s199 = sphi 0, %s196
      %s200 = sphi 0, %s199
      %s216 = sphi 0, %s200
      %s222 = sphi 0, %s224
      %s225 = sphi 0, %s222
      %s226 = sphi 0, %s225
      %s242 = sphi 0, %s226
      %s248 = sphi 0, %s250
      %s251 = sphi 0, %s248
      %s252 = sphi 0, %s251
      %s268 = sphi 0, %s252
      %s274 = sphi 0, %s276
      %s277 = sphi 0, %s274
      %s278 = sphi 0, %s277
      %s294 = sphi 0, %s278
      %s300 = sphi 0, %s302
      %s303 = sphi 0, %s300
      %s304 = sphi 0, %s303
      %s320 = sphi 0, %s304
    $region4: #{tpu_custom_call.1} parent=1 // loop_header_branch
      %26 = sbr.rel (%p24) target = $region8
    $region5: #{tpu_custom_call.1} parent=1 // loop_body
      %s28 = ssub.s32 %s23, 1
      %s29 = ssub.s32 %s23, 2
      %s36 = sadd.s32 1, %s31
      %p37 = scmp.ge.s32.totalorder %s36, 2
      %s38 = scalar_select %p37, 0, %s36
      %s39 = sadd.s32 1, %s30
      %s40 = scalar_select %p37, %s39, %s30
      %p41 = scmp.ge.s32.totalorder %s40, 2
      %s42 = scalar_select %p41, 0, %s40
      %s43 = ssub.s32 %s30, %s42
      %p44 = scmp.eq.s32.totalorder %s43, 0
      %s46 = sadd.s32 %s45, 1
      %s47 = scalar_select %p44, %s45, %s46
      %p50 = pneg %p44
      %p51 = scmp.eq.s32.totalorder %s23, 3
      %p52 = por %p50, %p51
      %p53 = scmp.ne.s32.totalorder %s45, %s48
      %p54 = scmp.eq.s32.totalorder %s23, 0
      %p55 = por %p53, %p54
      %p56 = scmp.ne.s32.totalorder %s45, %s48
      %p57 = scmp.eq.s32.totalorder %s28, 3
      %p58 = por %p56, %p57
      %p59 = scmp.ne.s32.totalorder %s48, %s49
      %p60 = scmp.eq.s32.totalorder %s28, 0
      %p61 = por %p59, %p60
      %p62 = scmp.ne.s32.totalorder %s48, %s49
      %p63 = scmp.eq.s32.totalorder %s29, 3
      %p64 = por %p62, %p63
      %p66 = scmp.ne.s32.totalorder %s49, %s65
      %p67 = scmp.eq.s32.totalorder %s29, 0
      %p68 = por %p66, %p67
      %s69 = ssub.s32 %s30, %s42
      %p70 = scmp.eq.s32.totalorder %s69, 0
      %s72 = sadd.s32 %s71, 1
      %s73 = scalar_select %p70, %s71, %s72
      %p76 = pneg %p70
      %p77 = scmp.eq.s32.totalorder %s23, 3
      %p78 = por %p76, %p77
      %p79 = scmp.ne.s32.totalorder %s71, %s74
      %p80 = scmp.eq.s32.totalorder %s23, 0
      %p81 = por %p79, %p80
      %p82 = scmp.ne.s32.totalorder %s71, %s74
      %p83 = scmp.eq.s32.totalorder %s28, 3
      %p84 = por %p82, %p83
      %p85 = scmp.ne.s32.totalorder %s74, %s75
      %p86 = scmp.eq.s32.totalorder %s28, 0
      %p87 = por %p85, %p86
      %p88 = scmp.ne.s32.totalorder %s74, %s75
      %p89 = scmp.eq.s32.totalorder %s29, 3
      %p90 = por %p88, %p89
      %p92 = scmp.ne.s32.totalorder %s75, %s91
      %p93 = scmp.eq.s32.totalorder %s29, 0
      %p94 = por %p92, %p93
      %s96 = sadd.s32 %s95, 1
      %p99 = scmp.eq.s32.totalorder %s23, 3
      %p100 = scmp.ne.s32.totalorder %s95, %s97
      %p101 = scmp.eq.s32.totalorder %s23, 0
      %p102 = por %p100, %p101
      %p103 = scmp.ne.s32.totalorder %s95, %s97
      %p104 = scmp.eq.s32.totalorder %s28, 3
      %p105 = por %p103, %p104
      %p106 = scmp.ne.s32.totalorder %s97, %s98
      %p107 = scmp.eq.s32.totalorder %s28, 0
      %p108 = por %p106, %p107
      %p109 = scmp.ne.s32.totalorder %s97, %s98
      %p110 = scmp.eq.s32.totalorder %s29, 3
      %p111 = por %p109, %p110
      %p113 = scmp.ne.s32.totalorder %s98, %s112
      %p114 = scmp.eq.s32.totalorder %s29, 0
      %p115 = por %p113, %p114
      %s116 = ssub.s32 %s31, %s38
      %p117 = scmp.eq.s32.totalorder %s116, 0
      %s119 = sadd.s32 %s118, 1
      %s120 = scalar_select %p117, %s118, %s119
      %p123 = pneg %p117
      %p124 = scmp.eq.s32.totalorder %s23, 3
      %p125 = por %p123, %p124
      %p126 = scmp.ne.s32.totalorder %s118, %s121
      %p127 = scmp.eq.s32.totalorder %s23, 0
      %p128 = por %p126, %p127
      %p129 = scmp.ne.s32.totalorder %s118, %s121
      %p130 = scmp.eq.s32.totalorder %s28, 3
      %p131 = por %p129, %p130
      %p132 = scmp.ne.s32.totalorder %s121, %s122
      %p133 = scmp.eq.s32.totalorder %s28, 0
      %p134 = por %p132, %p133
      %p135 = scmp.ne.s32.totalorder %s121, %s122
      %p136 = scmp.eq.s32.totalorder %s29, 3
      %p137 = por %p135, %p136
      %p139 = scmp.ne.s32.totalorder %s122, %s138
      %p140 = scmp.eq.s32.totalorder %s29, 0
      %p141 = por %p139, %p140
      %s142 = ssub.s32 %s31, %s38
      %p143 = scmp.eq.s32.totalorder %s142, 0
      %s145 = sadd.s32 %s144, 1
      %s146 = scalar_select %p143, %s144, %s145
      %p149 = pneg %p143
      %p150 = scmp.eq.s32.totalorder %s23, 3
      %p151 = por %p149, %p150
      %p152 = scmp.ne.s32.totalorder %s144, %s147
      %p153 = scmp.eq.s32.totalorder %s23, 0
      %p154 = por %p152, %p153
      %p155 = scmp.ne.s32.totalorder %s144, %s147
      %p156 = scmp.eq.s32.totalorder %s28, 3
      %p157 = por %p155, %p156
      %p158 = scmp.ne.s32.totalorder %s147, %s148
      %p159 = scmp.eq.s32.totalorder %s28, 0
      %p160 = por %p158, %p159
      %p161 = scmp.ne.s32.totalorder %s147, %s148
      %p162 = scmp.eq.s32.totalorder %s29, 3
      %p163 = por %p161, %p162
      %p165 = scmp.ne.s32.totalorder %s148, %s164
      %p166 = scmp.eq.s32.totalorder %s29, 0
      %p167 = por %p165, %p166
      %s168 = ssub.s32 %s31, %s38
      %p169 = scmp.eq.s32.totalorder %s168, 0
      %s171 = sadd.s32 %s170, 1
      %s172 = scalar_select %p169, %s170, %s171
      %p175 = pneg %p169
      %p176 = scmp.eq.s32.totalorder %s23, 3
      %p177 = por %p175, %p176
      %p178 = scmp.ne.s32.totalorder %s170, %s173
      %p179 = scmp.eq.s32.totalorder %s23, 0
      %p180 = por %p178, %p179
      %p181 = scmp.ne.s32.totalorder %s170, %s173
      %p182 = scmp.eq.s32.totalorder %s28, 3
      %p183 = por %p181, %p182
      %p184 = scmp.ne.s32.totalorder %s173, %s174
      %p185 = scmp.eq.s32.totalorder %s28, 0
      %p186 = por %p184, %p185
      %p187 = scmp.ne.s32.totalorder %s173, %s174
      %p188 = scmp.eq.s32.totalorder %s29, 3
      %p189 = por %p187, %p188
      %p191 = scmp.ne.s32.totalorder %s174, %s190
      %p192 = scmp.eq.s32.totalorder %s29, 0
      %p193 = por %p191, %p192
      %s194 = ssub.s32 %s31, %s38
      %p195 = scmp.eq.s32.totalorder %s194, 0
      %s197 = sadd.s32 %s196, 1
      %s198 = scalar_select %p195, %s196, %s197
      %p201 = pneg %p195
      %p202 = scmp.eq.s32.totalorder %s23, 3
      %p203 = por %p201, %p202
      %p204 = scmp.ne.s32.totalorder %s196, %s199
      %p205 = scmp.eq.s32.totalorder %s23, 0
      %p206 = por %p204, %p205
      %p207 = scmp.ne.s32.totalorder %s196, %s199
      %p208 = scmp.eq.s32.totalorder %s28, 3
      %p209 = por %p207, %p208
      %p210 = scmp.ne.s32.totalorder %s199, %s200
      %p211 = scmp.eq.s32.totalorder %s28, 0
      %p212 = por %p210, %p211
      %p213 = scmp.ne.s32.totalorder %s199, %s200
      %p214 = scmp.eq.s32.totalorder %s29, 3
      %p215 = por %p213, %p214
      %p217 = scmp.ne.s32.totalorder %s200, %s216
      %p218 = scmp.eq.s32.totalorder %s29, 0
      %p219 = por %p217, %p218
      %s220 = ssub.s32 %s31, %s38
      %p221 = scmp.eq.s32.totalorder %s220, 0
      %s223 = sadd.s32 %s222, 1
      %s224 = scalar_select %p221, %s222, %s223
      %p227 = pneg %p221
      %p228 = scmp.eq.s32.totalorder %s23, 3
      %p229 = por %p227, %p228
      %p230 = scmp.ne.s32.totalorder %s222, %s225
      %p231 = scmp.eq.s32.totalorder %s23, 0
      %p232 = por %p230, %p231
      %p233 = scmp.ne.s32.totalorder %s222, %s225
      %p234 = scmp.eq.s32.totalorder %s28, 3
      %p235 = por %p233, %p234
      %p236 = scmp.ne.s32.totalorder %s225, %s226
      %p237 = scmp.eq.s32.totalorder %s28, 0
      %p238 = por %p236, %p237
      %p239 = scmp.ne.s32.totalorder %s225, %s226
      %p240 = scmp.eq.s32.totalorder %s29, 3
      %p241 = por %p239, %p240
      %p243 = scmp.ne.s32.totalorder %s226, %s242
      %p244 = scmp.eq.s32.totalorder %s29, 0
      %p245 = por %p243, %p244
      %s246 = ssub.s32 %s31, %s38
      %p247 = scmp.eq.s32.totalorder %s246, 0
      %s249 = sadd.s32 %s248, 1
      %s250 = scalar_select %p247, %s248, %s249
      %p253 = pneg %p247
      %p254 = scmp.eq.s32.totalorder %s23, 3
      %p255 = por %p253, %p254
      %p256 = scmp.ne.s32.totalorder %s248, %s251
      %p257 = scmp.eq.s32.totalorder %s23, 0
      %p258 = por %p256, %p257
      %p259 = scmp.ne.s32.totalorder %s248, %s251
      %p260 = scmp.eq.s32.totalorder %s28, 3
      %p261 = por %p259, %p260
      %p262 = scmp.ne.s32.totalorder %s251, %s252
      %p263 = scmp.eq.s32.totalorder %s28, 0
      %p264 = por %p262, %p263
      %p265 = scmp.ne.s32.totalorder %s251, %s252
      %p266 = scmp.eq.s32.totalorder %s29, 3
      %p267 = por %p265, %p266
      %p269 = scmp.ne.s32.totalorder %s252, %s268
      %p270 = scmp.eq.s32.totalorder %s29, 0
      %p271 = por %p269, %p270
      %s272 = ssub.s32 %s31, %s38
      %p273 = scmp.eq.s32.totalorder %s272, 0
      %s275 = sadd.s32 %s274, 1
      %s276 = scalar_select %p273, %s274, %s275
      %p279 = pneg %p273
      %p280 = scmp.eq.s32.totalorder %s23, 3
      %p281 = por %p279, %p280
      %p282 = scmp.ne.s32.totalorder %s274, %s277
      %p283 = scmp.eq.s32.totalorder %s23, 0
      %p284 = por %p282, %p283
      %p285 = scmp.ne.s32.totalorder %s274, %s277
      %p286 = scmp.eq.s32.totalorder %s28, 3
      %p287 = por %p285, %p286
      %p288 = scmp.ne.s32.totalorder %s277, %s278
      %p289 = scmp.eq.s32.totalorder %s28, 0
      %p290 = por %p288, %p289
      %p291 = scmp.ne.s32.totalorder %s277, %s278
      %p292 = scmp.eq.s32.totalorder %s29, 3
      %p293 = por %p291, %p292
      %p295 = scmp.ne.s32.totalorder %s278, %s294
      %p296 = scmp.eq.s32.totalorder %s29, 0
      %p297 = por %p295, %p296
      %s298 = ssub.s32 %s30, %s42
      %p299 = scmp.eq.s32.totalorder %s298, 0
      %s301 = sadd.s32 %s300, 1
      %s302 = scalar_select %p299, %s300, %s301
      %p305 = pneg %p299
      %p306 = scmp.eq.s32.totalorder %s23, 3
      %p307 = por %p305, %p306
      %p308 = scmp.ne.s32.totalorder %s300, %s303
      %p309 = scmp.eq.s32.totalorder %s23, 0
      %p310 = por %p308, %p309
      %p311 = scmp.ne.s32.totalorder %s300, %s303
      %p312 = scmp.eq.s32.totalorder %s28, 3
      %p313 = por %p311, %p312
      %p314 = scmp.ne.s32.totalorder %s303, %s304
      %p315 = scmp.eq.s32.totalorder %s28, 0
      %p316 = por %p314, %p315
      %p317 = scmp.ne.s32.totalorder %s303, %s304
      %p318 = scmp.eq.s32.totalorder %s29, 3
      %p319 = por %p317, %p318
      %p321 = scmp.ne.s32.totalorder %s304, %s320
      %p322 = scmp.eq.s32.totalorder %s29, 0
      %p323 = por %p321, %p322
      %p324 = scmp.le.s32.totalorder 1, %s23
      %p325 = scmp.lt.s32.totalorder %s23, 5
      %p326 = pnand %p324, %p325
      %p327 = pneg %p326
      // Predicated region
      $region9: #{tpu_custom_call.1} parent=5 // pred_check
        _
      $region10: #{tpu_custom_call.1} parent=5 // pred_check_branch
        %329 = sbr.rel (%p326) target = $region12
      $region11: #{tpu_custom_call.1} parent=5 // pred_region
        %s330 = ssub.s32 %s23, 1
        // Predicated region
        $region13: #{tpu_custom_call.1} parent=11 // pred_check
          %p331 = pneg %p108
        $region14: #{tpu_custom_call.1} parent=11 // pred_check_branch
          %333 = sbr.rel (%p331) target = $region16
        $region15: #{tpu_custom_call.1} parent=11 // pred_region
          %s335 = ssub.s32 128, 128
          %336 = vsyncadd [#allocation4], %s335
          %s338 = sshll.u32 [#allocation3], 4
          %s339 = int_to_ptr.vmem [resolvable:$true] %s338
          %341 = dma.hbm_to_vmem [thread:$0]  %s2, 128, %s339, [#allocation4]
        $region16: #{tpu_custom_call.1} parent=11 // pred_fallthru
          _
      $region12: #{tpu_custom_call.1} parent=5 // pred_fallthru
        _
      %p342 = scmp.lt.s32.totalorder %s23, 4
      // Predicated region
      $region17: #{tpu_custom_call.1} parent=5 // pred_check
        %p343 = pneg %p342
      $region18: #{tpu_custom_call.1} parent=5 // pred_check_branch
        %345 = sbr.rel (%p343) target = $region20
      $region19: #{tpu_custom_call.1} parent=5 // pred_region
        // Predicated region
        $region21: #{tpu_custom_call.1} parent=19 // pred_check
          %p346 = pneg %p55
        $region22: #{tpu_custom_call.1} parent=19 // pred_check_branch
          %348 = sbr.rel (%p346) target = $region24
        $region23: #{tpu_custom_call.1} parent=19 // pred_region
          %p349 = scmp.lt.s32.totalorder %s30, 1
          %s350 = scalar_select %p349, %s30, 1
          %s351 = smul.addr %s350, 8
          %s352 = scalar_lea.vmem %s0, %s351
        $region24: #{tpu_custom_call.1} parent=19 // pred_fallthru
          _
        // Predicated region
        $region25: #{tpu_custom_call.1} parent=19 // pred_check
          %p353 = pneg %p81
        $region26: #{tpu_custom_call.1} parent=19 // pred_check_branch
          %355 = sbr.rel (%p353) target = $region28
        $region27: #{tpu_custom_call.1} parent=19 // pred_region
          %p356 = scmp.lt.s32.totalorder %s30, 1
          %s357 = scalar_select %p356, %s30, 1
          %s358 = scalar_lea.vmem %s1, %s357
        $region28: #{tpu_custom_call.1} parent=19 // pred_fallthru
          _
        // Predicated region
        $region29: #{tpu_custom_call.1} parent=19 // pred_check
          %p359 = pneg %p128
        $region30: #{tpu_custom_call.1} parent=19 // pred_check_branch
          %361 = sbr.rel (%p359) target = $region32
        $region31: #{tpu_custom_call.1} parent=19 // pred_region
          %p362 = scmp.lt.s32.totalorder %s31, 1
          %s363 = scalar_select %p362, %s31, 1
          %s364 = smul.addr %s363, 4
          %s365 = smul.addr %s364, 4
          %s366 = scalar_lea.vmem %s3, %s365
        $region32: #{tpu_custom_call.1} parent=19 // pred_fallthru
          _
        // Predicated region
        $region33: #{tpu_custom_call.1} parent=19 // pred_check
          %p367 = pneg %p154
        $region34: #{tpu_custom_call.1} parent=19 // pred_check_branch
          %369 = sbr.rel (%p367) target = $region36
        $region35: #{tpu_custom_call.1} parent=19 // pred_region
          %s370 = sand.u32 %s23, 1
          %s371 = scalar_lea.sflag [#allocation7], %s370
          %s372 = sand.u32 %s144, 1
          %s373 = scalar_lea.vmem [#allocation6], %s372
          %s375 = ssub.s32 16, 16
          %376 = vsyncadd %s371, %s375
          %s377 = smul.addr %s31, 16
          %s378 = scalar_lea.hbm %s4, %s377
          %s380 = sshll.u32 %s373, 4
          %s381 = int_to_ptr.vmem [resolvable:$true] %s380
          %383 = dma.hbm_to_vmem [thread:$0]  %s378, 16, %s381, %s371
        $region36: #{tpu_custom_call.1} parent=19 // pred_fallthru
          _
        // Predicated region
        $region37: #{tpu_custom_call.1} parent=19 // pred_check
          %p384 = pneg %p180
        $region38: #{tpu_custom_call.1} parent=19 // pred_check_branch
          %386 = sbr.rel (%p384) target = $region40
        $region39: #{tpu_custom_call.1} parent=19 // pred_region
          %p387 = scmp.lt.s32.totalorder %s31, 1
          %s388 = scalar_select %p387, %s31, 1
          %s389 = smul.addr %s388, 4
          %s390 = smul.addr %s389, 4
          %s391 = scalar_lea.vmem %s5, %s390
        $region40: #{tpu_custom_call.1} parent=19 // pred_fallthru
          _
        // Predicated region
        $region41: #{tpu_custom_call.1} parent=19 // pred_check
          %p392 = pneg %p206
        $region42: #{tpu_custom_call.1} parent=19 // pred_check_branch
          %394 = sbr.rel (%p392) target = $region44
        $region43: #{tpu_custom_call.1} parent=19 // pred_region
          %p395 = scmp.lt.s32.totalorder %s31, 1
          %s396 = scalar_select %p395, %s31, 1
          %s397 = smul.addr %s396, 4
          %s398 = smul.addr %s397, 4
          %s399 = scalar_lea.vmem %s6, %s398
        $region44: #{tpu_custom_call.1} parent=19 // pred_fallthru
          _
        // Predicated region
        $region45: #{tpu_custom_call.1} parent=19 // pred_check
          %p400 = pneg %p232
        $region46: #{tpu_custom_call.1} parent=19 // pred_check_branch
          %402 = sbr.rel (%p400) target = $region48
        $region47: #{tpu_custom_call.1} parent=19 // pred_region
          %s403 = sand.u32 %s23, 1
          %s404 = scalar_lea.sflag [#allocation7], %s403
          %s405 = sand.u32 %s222, 1
          %s406 = scalar_lea.vmem [#allocation8], %s405
          %s408 = ssub.s32 16, 16
          %409 = vsyncadd %s404, %s408
          %s410 = smul.addr %s31, 16
          %s411 = scalar_lea.hbm %s7, %s410
          %s413 = sshll.u32 %s406, 4
          %s414 = int_to_ptr.vmem [resolvable:$true] %s413
          %416 = dma.hbm_to_vmem [thread:$0]  %s411, 16, %s414, %s404
        $region48: #{tpu_custom_call.1} parent=19 // pred_fallthru
          _
        // Predicated region
        $region49: #{tpu_custom_call.1} parent=19 // pred_check
          %p417 = pneg %p258
        $region50: #{tpu_custom_call.1} parent=19 // pred_check_branch
          %419 = sbr.rel (%p417) target = $region52
        $region51: #{tpu_custom_call.1} parent=19 // pred_region
          %p420 = scmp.lt.s32.totalorder %s31, 1
          %s421 = scalar_select %p420, %s31, 1
          %s422 = smul.addr %s421, 8
          %s423 = smul.addr %s422, 4
          %s424 = scalar_lea.vmem %s8, %s423
        $region52: #{tpu_custom_call.1} parent=19 // pred_fallthru
          _
        // Predicated region
        $region53: #{tpu_custom_call.1} parent=19 // pred_check
          %p425 = pneg %p284
        $region54: #{tpu_custom_call.1} parent=19 // pred_check_branch
          %427 = sbr.rel (%p425) target = $region56
        $region55: #{tpu_custom_call.1} parent=19 // pred_region
          %p428 = scmp.lt.s32.totalorder %s31, 1
          %s429 = scalar_select %p428, %s31, 1
          %s430 = smul.addr %s429, 8
          %s431 = scalar_lea.vmem %s9, %s430
        $region56: #{tpu_custom_call.1} parent=19 // pred_fallthru
          _
      $region20: #{tpu_custom_call.1} parent=5 // pred_fallthru
        _
      %p432 = scmp.le.s32.totalorder 1, %s23
      %p433 = scmp.lt.s32.totalorder %s23, 5
      %p434 = pnand %p432, %p433
      %p435 = pneg %p434
      // Predicated region
      $region57: #{tpu_custom_call.1} parent=5 // pred_check
        _
      $region58: #{tpu_custom_call.1} parent=5 // pred_check_branch
        %437 = sbr.rel (%p434) target = $region60
      $region59: #{tpu_custom_call.1} parent=5 // pred_region
        %s438 = ssub.s32 %s23, 1
        // Predicated region
        $region61: #{tpu_custom_call.1} parent=59 // pred_check
          %p439 = pneg %p108
        $region62: #{tpu_custom_call.1} parent=59 // pred_check_branch
          %441 = sbr.rel (%p439) target = $region64
        $region63: #{tpu_custom_call.1} parent=59 // pred_region
          %442 = dma.done [#allocation4], 128
        $region64: #{tpu_custom_call.1} parent=59 // pred_fallthru
          _
        %s443 = sand.u32 %s28, 1
        %s444 = scalar_lea.sflag [#allocation7], %s443
        %s445 = sand.u32 %s147, 1
        %s446 = scalar_lea.vmem [#allocation6], %s445
        // Predicated region
        $region65: #{tpu_custom_call.1} parent=59 // pred_check
          %p447 = pneg %p160
        $region66: #{tpu_custom_call.1} parent=59 // pred_check_branch
          %449 = sbr.rel (%p447) target = $region68
        $region67: #{tpu_custom_call.1} parent=59 // pred_region
          %450 = dma.done %s444, 16
        $region68: #{tpu_custom_call.1} parent=59 // pred_fallthru
          _
        %s451 = sand.u32 %s28, 1
        %s452 = scalar_lea.sflag [#allocation7], %s451
        %s453 = sand.u32 %s225, 1
        %s454 = scalar_lea.vmem [#allocation8], %s453
        // Predicated region
        $region69: #{tpu_custom_call.1} parent=59 // pred_check
          %p455 = pneg %p238
        $region70: #{tpu_custom_call.1} parent=59 // pred_check_branch
          %457 = sbr.rel (%p455) target = $region72
        $region71: #{tpu_custom_call.1} parent=59 // pred_region
          %458 = dma.done %s452, 16
        $region72: #{tpu_custom_call.1} parent=59 // pred_fallthru
          _
        %p459 = scmp.lt.s32.totalorder %s32, 1
        %s460 = scalar_select %p459, %s32, 1
        %s461 = smul.addr %s460, 8
        %s462 = scalar_lea.vmem %s0, %s461
        %p463 = pneg %p61
        %p464 = pneg %p58
        %p465 = scmp.lt.s32.totalorder %s32, 1
        %s466 = scalar_select %p465, %s32, 1
        %s467 = scalar_lea.vmem %s1, %s466
        %p468 = pneg %p87
        %p469 = pneg %p84
        %p470 = pneg %p108
        %p471 = pneg %p105
        %p472 = scmp.lt.s32.totalorder %s33, 1
        %s473 = scalar_select %p472, %s33, 1
        %s474 = smul.addr %s473, 4
        %s475 = smul.addr %s474, 4
        %s476 = scalar_lea.vmem %s3, %s475
        %p477 = pneg %p134
        %p478 = pneg %p131
        %s479 = sand.u32 %s28, 1
        %s480 = scalar_lea.sflag [#allocation7], %s479
        %s481 = sand.u32 %s147, 1
        %s482 = scalar_lea.vmem [#allocation6], %s481
        %p483 = pneg %p160
        %p484 = pneg %p157
        %p485 = scmp.lt.s32.totalorder %s33, 1
        %s486 = scalar_select %p485, %s33, 1
        %s487 = smul.addr %s486, 4
        %s488 = smul.addr %s487, 4
        %s489 = scalar_lea.vmem %s5, %s488
        %p490 = pneg %p186
        %p491 = pneg %p183
        %p492 = scmp.lt.s32.totalorder %s33, 1
        %s493 = scalar_select %p492, %s33, 1
        %s494 = smul.addr %s493, 4
        %s495 = smul.addr %s494, 4
        %s496 = scalar_lea.vmem %s6, %s495
        %p497 = pneg %p212
        %p498 = pneg %p209
        %s499 = sand.u32 %s28, 1
        %s500 = scalar_lea.sflag [#allocation7], %s499
        %s501 = sand.u32 %s225, 1
        %s502 = scalar_lea.vmem [#allocation8], %s501
        %p503 = pneg %p238
        %p504 = pneg %p235
        %p505 = scmp.lt.s32.totalorder %s33, 1
        %s506 = scalar_select %p505, %s33, 1
        %s507 = smul.addr %s506, 8
        %s508 = smul.addr %s507, 4
        %s509 = scalar_lea.vmem %s8, %s508
        %p510 = pneg %p264
        %p511 = pneg %p261
        %p512 = scmp.lt.s32.totalorder %s33, 1
        %s513 = scalar_select %p512, %s33, 1
        %s514 = smul.addr %s513, 8
        %s515 = scalar_lea.vmem %s9, %s514
        %p516 = pneg %p290
        %p517 = pneg %p287
        %p518 = pneg %p316
        %p519 = pneg %p313
        %s520 = sand.u32 %s303, 1
        %s521 = scalar_lea.sflag [#allocation5], %s520
        %s522 = sand.u32 %s303, 1
        %s523 = smul.addr %s522, 8
        %s524 = scalar_lea.vmem [#allocation9], %s523
        %p525 = scmp.lt.s32.totalorder %s32, 1
        %s526 = scalar_select %p525, %s32, 1
        %s527 = smul.addr %s526, 8
        %s528 = scalar_lea.vmem %s0, %s527
        %p529 = scmp.lt.s32.totalorder %s32, 1
        %s530 = scalar_select %p529, %s32, 1
        %s531 = scalar_lea.vmem %s1, %s530
        %p532 = scmp.lt.s32.totalorder %s33, 1
        %s533 = scalar_select %p532, %s33, 1
        %s534 = smul.addr %s533, 4
        %s535 = smul.addr %s534, 4
        %s536 = scalar_lea.vmem %s3, %s535
        %p537 = scmp.lt.s32.totalorder %s33, 1
        %s538 = scalar_select %p537, %s33, 1
        %s539 = smul.addr %s538, 4
        %s540 = smul.addr %s539, 4
        %s541 = scalar_lea.vmem %s5, %s540
        %p542 = scmp.lt.s32.totalorder %s33, 1
        %s543 = scalar_select %p542, %s33, 1
        %s544 = smul.addr %s543, 4
        %s545 = smul.addr %s544, 4
        %s546 = scalar_lea.vmem %s6, %s545
        %p547 = scmp.lt.s32.totalorder %s33, 1
        %s548 = scalar_select %p547, %s33, 1
        %s549 = smul.addr %s548, 8
        %s550 = smul.addr %s549, 4
        %s551 = scalar_lea.vmem %s8, %s550
        %p552 = scmp.lt.s32.totalorder %s33, 1
        %s553 = scalar_select %p552, %s33, 1
        %s554 = smul.addr %s553, 8
        %s555 = scalar_lea.vmem %s9, %s554
        %p557 = scmp.eq.s32.totalorder %s33, 0
        // Predicated region
        $region73: #{tpu_custom_call.1} parent=59 // pred_check
          %p558 = pneg %p557
        $region74: #{tpu_custom_call.1} parent=59 // pred_check_branch
          %560 = sbr.rel (%p558) target = $region76
        $region75: #{tpu_custom_call.1} parent=59 // pred_region
          %v561 = vld [vmem:[%s528] sm:$0xff]
          %v562 = vmul.f32 %v561, 5.656854
          %v563 = vld [vmem:[#allocation3] sm:$0xff]
          %v564 = vadd.f32 %v562, %v563
          %vm565 = vcmask 261120
          %566 = vst.msk [vmem:[%s524] sm:$0xff] %vm565, %v564
        $region76: #{tpu_custom_call.1} parent=59 // pred_fallthru
          _
        %v567 = vld [vmem:[%s524] sm:$0xff]
        %v568 = vld [vmem:[%s531] sm:$0x1]
        %v569 = vmul.f32 %v568, -1e+09
        %v571 = vlaneseq
        %v572 = vshrl.u32 %v571, 7
        %v573 = vsub.s32 0, %v572
        %v574 = vrot.slane %v569, %v573
        %v576 = vld [vmem:[%s536] sm:$0xf]
        %v577 = vld [vmem:[%s536 + $0x4] sm:$0xf]
        %v578 = vld [vmem:[%s536 + $0x8] sm:$0xf]
        %v579 = vld [vmem:[%s536 + $0xc] sm:$0xf]
        %v580 = vld [vmem:[%s541] sm:$0xf]
        %v581 = vld [vmem:[%s541 + $0x4] sm:$0xf]
        %v582 = vld [vmem:[%s541 + $0x8] sm:$0xf]
        %v583 = vld [vmem:[%s541 + $0xc] sm:$0xf]
        %v584 = vld [vmem:[%s546] sm:$0xf]
        %v585 = vld [vmem:[%s546 + $0x4] sm:$0xf]
        %v586 = vld [vmem:[%s546 + $0x8] sm:$0xf]
        %v587 = vld [vmem:[%s546 + $0xc] sm:$0xf]
        %v588 = vld [vmem:[%s551] sm:$0xf]
        %v589 = vld [vmem:[%s551 + $0x4] sm:$0xf]
        %v590 = vld [vmem:[%s551 + $0x8] sm:$0xf]
        %v591 = vld [vmem:[%s551 + $0xc] sm:$0xf]
        %v592 = vld [vmem:[%s551 + $0x10] sm:$0xf]
        %v593 = vld [vmem:[%s551 + $0x14] sm:$0xf]
        %v594 = vld [vmem:[%s551 + $0x18] sm:$0xf]
        %v595 = vld [vmem:[%s551 + $0x1c] sm:$0xf]
        %v596 = vld [vmem:[%s446] sm:$0x1]
        %v597 = vld [vmem:[%s454] sm:$0x1]
        %v598 = vld [vmem:[%s555] sm:$0x3f]
        %v599 = vpack.c.bf16 %v567, %v567
        %v601 = vlaneseq
        %v602 = vshrl.u32 %v601, 7
        %v603 = vsub.s32 0, %v602
        %v604 = vrot.slane %v596, %v603
        %v610 = vunpack.c.l.b16 %v576
        %v611 = vunpack.c.l.b16 %v577
        %v612 = vunpack.c.l.b16 %v578
        %v613 = vunpack.c.l.b16 %v579
        %v614 = vpack.c.b16 %v611, %v610
        %v615 = vpack.c.b16 %v613, %v612
        %vm618 = vcmask 261120
        %v620 = vsel %vm618, %v599, 0
        %622 = vmatprep.subr.bf16.mxu0 0
        %623 = vmatpush1.bf16.msra.mxu0 %v614
        %624 = vmatprep.subr.bf16.mxu0 0
        %625 = vmatpush1.bf16.msra.mxu0 %v615
        %626 = vmatprep.subr.bf16.mxu0 0
        %627 = vmatpush1.bf16.msra.mxu0 0
        %628 = vmatprep.subr.bf16.mxu0 0
        %629 = vmatpush1.bf16.msra.mxu0 0
        %630 = vmatprep.subr.bf16.mxu0 0
        %631 = vmatpush1.bf16.msra.mxu0 0
        %632 = vmatprep.subr.bf16.mxu0 0
        %633 = vmatpush1.bf16.msra.mxu0 0
        %634 = vmatprep.subr.bf16.mxu0 0
        %635 = vmatpush1.bf16.msra.mxu0 0
        %636 = vmatprep.subr.bf16.mxu0 0
        %637 = vmatpush1.bf16.msra.mxu0 0
        %638 = vmatprep.subr.bf16.mxu0 0
        %639 = vmatpush1.bf16.msra.mxu0 0
        %640 = vmatprep.subr.bf16.mxu0 0
        %641 = vmatpush1.bf16.msra.mxu0 0
        %642 = vmatprep.subr.bf16.mxu0 0
        %643 = vmatpush1.bf16.msra.mxu0 0
        %644 = vmatprep.subr.bf16.mxu0 0
        %645 = vmatpush1.bf16.msra.mxu0 0
        %646 = vmatprep.subr.bf16.mxu0 0
        %647 = vmatpush1.bf16.msra.mxu0 0
        %648 = vmatprep.subr.bf16.mxu0 0
        %649 = vmatpush1.bf16.msra.mxu0 0
        %650 = vmatprep.subr.bf16.mxu0 0
        %651 = vmatpush1.bf16.msra.mxu0 0
        %652 = vmatprep.subr.bf16.mxu0 0
        %653 = vmatpush1.bf16.msra.mxu0 0
        %654 = vmatprep.mubr.bf16.mxu0 0
        %655 = vmatmul.mubr.bf16.gmra.mrb[0].mxu0 %v620
        %v656 = vpop.f32.mrb[0].mxu0
        %v657 = vadd.f32 %v604, %v656
        %v658 = vpop.f32.mrb[0].mxu0
        %v659 = vpop.f32.mrb[0].mxu0
        %v660 = vpop.f32.mrb[0].mxu0
        %661 = vdwg.mxu0
        %v662 = vpack.c.bf16 %v657, %v657
        %664 = vrot.lane.b32.xlu0 %v662, 96
        %v665 = vpop.permute.xlu0 %664
        %vm666 = vcmask 64512
        %v668 = vsel %vm666, %v662, 0
        %v671 = vsel %vm666, %v665, 0
        %673 = vmatprep.subr.bf16.mxu0 0
        %674 = vmatpush1.bf16.xpose.msra.mxu0 %v671
        %675 = vmatprep.subr.bf16.mxu0 0
        %676 = vmatpush1.bf16.xpose.msra.mxu0 0
        %677 = vmatprep.subr.bf16.mxu0 0
        %678 = vmatpush1.bf16.xpose.msra.mxu0 0
        %679 = vmatprep.subr.bf16.mxu0 0
        %680 = vmatpush1.bf16.xpose.msra.mxu0 0
        %681 = vmatprep.subr.bf16.mxu0 0
        %682 = vmatpush1.bf16.xpose.msra.mxu0 0
        %683 = vmatprep.subr.bf16.mxu0 0
        %684 = vmatpush1.bf16.xpose.msra.mxu0 0
        %685 = vmatprep.subr.bf16.mxu0 0
        %686 = vmatpush1.bf16.xpose.msra.mxu0 0
        %687 = vmatprep.subr.bf16.mxu0 0
        %688 = vmatpush1.bf16.xpose.msra.mxu0 0
        %689 = vmatprep.subr.bf16.mxu0 0
        %690 = vmatpush1.bf16.xpose.msra.mxu0 0
        %691 = vmatprep.subr.bf16.mxu0 0
        %692 = vmatpush1.bf16.xpose.msra.mxu0 0
        %693 = vmatprep.subr.bf16.mxu0 0
        %694 = vmatpush1.bf16.xpose.msra.mxu0 0
        %695 = vmatprep.subr.bf16.mxu0 0
        %696 = vmatpush1.bf16.xpose.msra.mxu0 0
        %697 = vmatprep.subr.bf16.mxu0 0
        %698 = vmatpush1.bf16.xpose.msra.mxu0 0
        %699 = vmatprep.subr.bf16.mxu0 0
        %700 = vmatpush1.bf16.xpose.msra.mxu0 0
        %701 = vmatprep.subr.bf16.mxu0 0
        %702 = vmatpush1.bf16.xpose.msra.mxu0 0
        %703 = vmatprep.subr.bf16.mxu0 0
        %704 = vmatpush1.bf16.xpose.msra.mxu0 0
        %705 = vmatprep.mubr.bf16.mxu0 0
        %706 = vmatmul.mubr.bf16.gmra.mrb[0].mxu0 %v668
        %v707 = vpop.f32.mrb[0].mxu0
        %v708 = vadd.f32 %v574, %v707
        %v709 = vpop.f32.mrb[0].mxu0
        %v710 = vpop.f32.mrb[0].mxu0
        %v711 = vpop.f32.mrb[0].mxu0
        %712 = vdwg.mxu0
        %v713 = vsel %vm666, %v708, -inf
        %714 = vmax.xlane.f32.xlu0 %v713
        %v715 = vpop.xlane.xlu0 %714
        %v716 = vsub.f32 %v708, %v715
        %v717 = vmul.f32 %v716, 1.442695
        %v718 = vpow.pop %v717
        %v719 = vsel %vm666, %v718, 0.0
        %720 = vadd.xlane.f32.xlu0 %v719
        %v721 = vpop.xlane.xlu0 %720
        %v722 = vrcp.pop %v721
        %v723 = vmul.f32 %v718, %v722
        %v724 = vpack.c.bf16 %v723, %v723
        %725 = vrot.lane.b32.xlu0 %v662, 64
        %v726 = vpop.permute.xlu0 %725
        %v728 = vsel %vm666, %v724, 0
        %vm730 = vcmask 1043456
        %v732 = vsel %vm730, %v726, 0
        %734 = vmatprep.subr.bf16.mxu0 0
        %735 = vmatpush1.bf16.msra.mxu0 %v732
        %736 = vmatprep.subr.bf16.mxu0 0
        %737 = vmatpush1.bf16.msra.mxu0 0
        %738 = vmatprep.subr.bf16.mxu0 0
        %739 = vmatpush1.bf16.msra.mxu0 0
        %740 = vmatprep.subr.bf16.mxu0 0
        %741 = vmatpush1.bf16.msra.mxu0 0
        %742 = vmatprep.subr.bf16.mxu0 0
        %743 = vmatpush1.bf16.msra.mxu0 0
        %744 = vmatprep.subr.bf16.mxu0 0
        %745 = vmatpush1.bf16.msra.mxu0 0
        %746 = vmatprep.subr.bf16.mxu0 0
        %747 = vmatpush1.bf16.msra.mxu0 0
        %748 = vmatprep.subr.bf16.mxu0 0
        %749 = vmatpush1.bf16.msra.mxu0 0
        %750 = vmatprep.subr.bf16.mxu0 0
        %751 = vmatpush1.bf16.msra.mxu0 0
        %752 = vmatprep.subr.bf16.mxu0 0
        %753 = vmatpush1.bf16.msra.mxu0 0
        %754 = vmatprep.subr.bf16.mxu0 0
        %755 = vmatpush1.bf16.msra.mxu0 0
        %756 = vmatprep.subr.bf16.mxu0 0
        %757 = vmatpush1.bf16.msra.mxu0 0
        %758 = vmatprep.subr.bf16.mxu0 0
        %759 = vmatpush1.bf16.msra.mxu0 0
        %760 = vmatprep.subr.bf16.mxu0 0
        %761 = vmatpush1.bf16.msra.mxu0 0
        %762 = vmatprep.subr.bf16.mxu0 0
        %763 = vmatpush1.bf16.msra.mxu0 0
        %764 = vmatprep.subr.bf16.mxu0 0
        %765 = vmatpush1.bf16.msra.mxu0 0
        %766 = vmatprep.mubr.bf16.mxu0 0
        %767 = vmatmul.mubr.bf16.gmra.mrb[0].mxu0 %v728
        %v768 = vpop.f32.mrb[0].mxu0
        %v769 = vadd.f32 0.0, %v768
        %v770 = vpop.f32.mrb[0].mxu0
        %v771 = vpop.f32.mrb[0].mxu0
        %v772 = vpop.f32.mrb[0].mxu0
        %773 = vdwg.mxu0
        %774 = vst.msk [vmem:[#allocation2] sm:$0xff] %vm666, %v769
        %775 = vrot.lane.b32.xlu0 %v662, 120
        %v776 = vpop.permute.xlu0 %775
        %777 = vrot.lane.b32.xlu0 %v662, 88
        %v778 = vpop.permute.xlu0 %777
        %v780 = vsel %vm666, %v776, 0
        %v783 = vsel %vm666, %v778, 0
        %785 = vmatprep.subr.bf16.mxu0 0
        %786 = vmatpush1.bf16.xpose.msra.mxu0 %v783
        %787 = vmatprep.subr.bf16.mxu0 0
        %788 = vmatpush1.bf16.xpose.msra.mxu0 0
        %789 = vmatprep.subr.bf16.mxu0 0
        %790 = vmatpush1.bf16.xpose.msra.mxu0 0
        %791 = vmatprep.subr.bf16.mxu0 0
        %792 = vmatpush1.bf16.xpose.msra.mxu0 0
        %793 = vmatprep.subr.bf16.mxu0 0
        %794 = vmatpush1.bf16.xpose.msra.mxu0 0
        %795 = vmatprep.subr.bf16.mxu0 0
        %796 = vmatpush1.bf16.xpose.msra.mxu0 0
        %797 = vmatprep.subr.bf16.mxu0 0
        %798 = vmatpush1.bf16.xpose.msra.mxu0 0
        %799 = vmatprep.subr.bf16.mxu0 0
        %800 = vmatpush1.bf16.xpose.msra.mxu0 0
        %801 = vmatprep.subr.bf16.mxu0 0
        %802 = vmatpush1.bf16.xpose.msra.mxu0 0
        %803 = vmatprep.subr.bf16.mxu0 0
        %804 = vmatpush1.bf16.xpose.msra.mxu0 0
        %805 = vmatprep.subr.bf16.mxu0 0
        %806 = vmatpush1.bf16.xpose.msra.mxu0 0
        %807 = vmatprep.subr.bf16.mxu0 0
        %808 = vmatpush1.bf16.xpose.msra.mxu0 0
        %809 = vmatprep.subr.bf16.mxu0 0
        %810 = vmatpush1.bf16.xpose.msra.mxu0 0
        %811 = vmatprep.subr.bf16.mxu0 0
        %812 = vmatpush1.bf16.xpose.msra.mxu0 0
        %813 = vmatprep.subr.bf16.mxu0 0
        %814 = vmatpush1.bf16.xpose.msra.mxu0 0
        %815 = vmatprep.subr.bf16.mxu0 0
        %816 = vmatpush1.bf16.xpose.msra.mxu0 0
        %817 = vmatprep.mubr.bf16.mxu0 0
        %818 = vmatmul.mubr.bf16.gmra.mrb[0].mxu0 %v780
        %v819 = vpop.f32.mrb[0].mxu0
        %v820 = vadd.f32 %v574, %v819
        %v821 = vpop.f32.mrb[0].mxu0
        %v822 = vpop.f32.mrb[0].mxu0
        %v823 = vpop.f32.mrb[0].mxu0
        %824 = vdwg.mxu0
        %v825 = vsel %vm666, %v820, -inf
        %826 = vmax.xlane.f32.xlu0 %v825
        %v827 = vpop.xlane.xlu0 %826
        %v828 = vsub.f32 %v820, %v827
        %v829 = vmul.f32 %v828, 1.442695
        %v830 = vpow.pop %v829
        %v831 = vsel %vm666, %v830, 0.0
        %832 = vadd.xlane.f32.xlu0 %v831
        %v833 = vpop.xlane.xlu0 %832
        %v834 = vrcp.pop %v833
        %v835 = vmul.f32 %v830, %v834
        %v836 = vpack.c.bf16 %v835, %v835
        %837 = vrot.lane.b32.xlu0 %v662, 56
        %v838 = vpop.permute.xlu0 %837
        %v840 = vsel %vm666, %v836, 0
        %v843 = vsel %vm730, %v838, 0
        %845 = vmatprep.subr.bf16.mxu0 0
        %846 = vmatpush1.bf16.msra.mxu0 %v843
        %847 = vmatprep.subr.bf16.mxu0 0
        %848 = vmatpush1.bf16.msra.mxu0 0
        %849 = vmatprep.subr.bf16.mxu0 0
        %850 = vmatpush1.bf16.msra.mxu0 0
        %851 = vmatprep.subr.bf16.mxu0 0
        %852 = vmatpush1.bf16.msra.mxu0 0
        %853 = vmatprep.subr.bf16.mxu0 0
        %854 = vmatpush1.bf16.msra.mxu0 0
        %855 = vmatprep.subr.bf16.mxu0 0
        %856 = vmatpush1.bf16.msra.mxu0 0
        %857 = vmatprep.subr.bf16.mxu0 0
        %858 = vmatpush1.bf16.msra.mxu0 0
        %859 = vmatprep.subr.bf16.mxu0 0
        %860 = vmatpush1.bf16.msra.mxu0 0
        %861 = vmatprep.subr.bf16.mxu0 0
        %862 = vmatpush1.bf16.msra.mxu0 0
        %863 = vmatprep.subr.bf16.mxu0 0
        %864 = vmatpush1.bf16.msra.mxu0 0
        %865 = vmatprep.subr.bf16.mxu0 0
        %866 = vmatpush1.bf16.msra.mxu0 0
        %867 = vmatprep.subr.bf16.mxu0 0
        %868 = vmatpush1.bf16.msra.mxu0 0
        %869 = vmatprep.subr.bf16.mxu0 0
        %870 = vmatpush1.bf16.msra.mxu0 0
        %871 = vmatprep.subr.bf16.mxu0 0
        %872 = vmatpush1.bf16.msra.mxu0 0
        %873 = vmatprep.subr.bf16.mxu0 0
        %874 = vmatpush1.bf16.msra.mxu0 0
        %875 = vmatprep.subr.bf16.mxu0 0
        %876 = vmatpush1.bf16.msra.mxu0 0
        %877 = vmatprep.mubr.bf16.mxu0 0
        %878 = vmatmul.mubr.bf16.gmra.mrb[0].mxu0 %v840
        %v879 = vpop.f32.mrb[0].mxu0
        %v880 = vadd.f32 0.0, %v879
        %v881 = vpop.f32.mrb[0].mxu0
        %v882 = vpop.f32.mrb[0].mxu0
        %v883 = vpop.f32.mrb[0].mxu0
        %884 = vdwg.mxu0
        %886 = vrot.lane.b32.xlu0 %v880, 8
        %v887 = vpop.permute.xlu0 %886
        %vm889 = vcmask 130112
        %890 = vst.msk [vmem:[#allocation2] sm:$0xff] %vm889, %v887
        %891 = vrot.lane.b32.xlu0 %v662, 112
        %v892 = vpop.permute.xlu0 %891
        %893 = vrot.lane.b32.xlu0 %v662, 80
        %v894 = vpop.permute.xlu0 %893
        %v896 = vsel %vm666, %v892, 0
        %v899 = vsel %vm666, %v894, 0
        %901 = vmatprep.subr.bf16.mxu0 0
        %902 = vmatpush1.bf16.xpose.msra.mxu0 %v899
        %903 = vmatprep.subr.bf16.mxu0 0
        %904 = vmatpush1.bf16.xpose.msra.mxu0 0
        %905 = vmatprep.subr.bf16.mxu0 0
        %906 = vmatpush1.bf16.xpose.msra.mxu0 0
        %907 = vmatprep.subr.bf16.mxu0 0
        %908 = vmatpush1.bf16.xpose.msra.mxu0 0
        %909 = vmatprep.subr.bf16.mxu0 0
        %910 = vmatpush1.bf16.xpose.msra.mxu0 0
        %911 = vmatprep.subr.bf16.mxu0 0
        %912 = vmatpush1.bf16.xpose.msra.mxu0 0
        %913 = vmatprep.subr.bf16.mxu0 0
        %914 = vmatpush1.bf16.xpose.msra.mxu0 0
        %915 = vmatprep.subr.bf16.mxu0 0
        %916 = vmatpush1.bf16.xpose.msra.mxu0 0
        %917 = vmatprep.subr.bf16.mxu0 0
        %918 = vmatpush1.bf16.xpose.msra.mxu0 0
        %919 = vmatprep.subr.bf16.mxu0 0
        %920 = vmatpush1.bf16.xpose.msra.mxu0 0
        %921 = vmatprep.subr.bf16.mxu0 0
        %922 = vmatpush1.bf16.xpose.msra.mxu0 0
        %923 = vmatprep.subr.bf16.mxu0 0
        %924 = vmatpush1.bf16.xpose.msra.mxu0 0
        %925 = vmatprep.subr.bf16.mxu0 0
        %926 = vmatpush1.bf16.xpose.msra.mxu0 0
        %927 = vmatprep.subr.bf16.mxu0 0
        %928 = vmatpush1.bf16.xpose.msra.mxu0 0
        %929 = vmatprep.subr.bf16.mxu0 0
        %930 = vmatpush1.bf16.xpose.msra.mxu0 0
        %931 = vmatprep.subr.bf16.mxu0 0
        %932 = vmatpush1.bf16.xpose.msra.mxu0 0
        %933 = vmatprep.mubr.bf16.mxu0 0
        %934 = vmatmul.mubr.bf16.gmra.mrb[0].mxu0 %v896
        %v935 = vpop.f32.mrb[0].mxu0
        %v936 = vadd.f32 %v574, %v935
        %v937 = vpop.f32.mrb[0].mxu0
        %v938 = vpop.f32.mrb[0].mxu0
        %v939 = vpop.f32.mrb[0].mxu0
        %940 = vdwg.mxu0
        %v941 = vsel %vm666, %v936, -inf
        %942 = vmax.xlane.f32.xlu0 %v941
        %v943 = vpop.xlane.xlu0 %942
        %v944 = vsub.f32 %v936, %v943
        %v945 = vmul.f32 %v944, 1.442695
        %v946 = vpow.pop %v945
        %v947 = vsel %vm666, %v946, 0.0
        %948 = vadd.xlane.f32.xlu0 %v947
        %v949 = vpop.xlane.xlu0 %948
        %v950 = vrcp.pop %v949
        %v951 = vmul.f32 %v946, %v950
        %v952 = vpack.c.bf16 %v951, %v951
        %953 = vrot.lane.b32.xlu0 %v662, 48
        %v954 = vpop.permute.xlu0 %953
        %v956 = vsel %vm666, %v952, 0
        %v959 = vsel %vm730, %v954, 0
        %961 = vmatprep.subr.bf16.mxu0 0
        %962 = vmatpush1.bf16.msra.mxu0 %v959
        %963 = vmatprep.subr.bf16.mxu0 0
        %964 = vmatpush1.bf16.msra.mxu0 0
        %965 = vmatprep.subr.bf16.mxu0 0
        %966 = vmatpush1.bf16.msra.mxu0 0
        %967 = vmatprep.subr.bf16.mxu0 0
        %968 = vmatpush1.bf16.msra.mxu0 0
        %969 = vmatprep.subr.bf16.mxu0 0
        %970 = vmatpush1.bf16.msra.mxu0 0
        %971 = vmatprep.subr.bf16.mxu0 0
        %972 = vmatpush1.bf16.msra.mxu0 0
        %973 = vmatprep.subr.bf16.mxu0 0
        %974 = vmatpush1.bf16.msra.mxu0 0
        %975 = vmatprep.subr.bf16.mxu0 0
        %976 = vmatpush1.bf16.msra.mxu0 0
        %977 = vmatprep.subr.bf16.mxu0 0
        %978 = vmatpush1.bf16.msra.mxu0 0
        %979 = vmatprep.subr.bf16.mxu0 0
        %980 = vmatpush1.bf16.msra.mxu0 0
        %981 = vmatprep.subr.bf16.mxu0 0
        %982 = vmatpush1.bf16.msra.mxu0 0
        %983 = vmatprep.subr.bf16.mxu0 0
        %984 = vmatpush1.bf16.msra.mxu0 0
        %985 = vmatprep.subr.bf16.mxu0 0
        %986 = vmatpush1.bf16.msra.mxu0 0
        %987 = vmatprep.subr.bf16.mxu0 0
        %988 = vmatpush1.bf16.msra.mxu0 0
        %989 = vmatprep.subr.bf16.mxu0 0
        %990 = vmatpush1.bf16.msra.mxu0 0
        %991 = vmatprep.subr.bf16.mxu0 0
        %992 = vmatpush1.bf16.msra.mxu0 0
        %993 = vmatprep.mubr.bf16.mxu0 0
        %994 = vmatmul.mubr.bf16.gmra.mrb[0].mxu0 %v956
        %v995 = vpop.f32.mrb[0].mxu0
        %v996 = vadd.f32 0.0, %v995
        %v997 = vpop.f32.mrb[0].mxu0
        %v998 = vpop.f32.mrb[0].mxu0
        %v999 = vpop.f32.mrb[0].mxu0
        %1000 = vdwg.mxu0
        %1002 = vrot.lane.b32.xlu0 %v996, 16
        %v1003 = vpop.permute.xlu0 %1002
        %vm1005 = vcmask 195712
        %1006 = vst.msk [vmem:[#allocation2] sm:$0xff] %vm1005, %v1003
        %1007 = vrot.lane.b32.xlu0 %v662, 104
        %v1008 = vpop.permute.xlu0 %1007
        %1009 = vrot.lane.b32.xlu0 %v662, 72
        %v1010 = vpop.permute.xlu0 %1009
        %v1012 = vsel %vm666, %v1008, 0
        %v1015 = vsel %vm666, %v1010, 0
        %1017 = vmatprep.subr.bf16.mxu0 0
        %1018 = vmatpush1.bf16.xpose.msra.mxu0 %v1015
        %1019 = vmatprep.subr.bf16.mxu0 0
        %1020 = vmatpush1.bf16.xpose.msra.mxu0 0
        %1021 = vmatprep.subr.bf16.mxu0 0
        %1022 = vmatpush1.bf16.xpose.msra.mxu0 0
        %1023 = vmatprep.subr.bf16.mxu0 0
        %1024 = vmatpush1.bf16.xpose.msra.mxu0 0
        %1025 = vmatprep.subr.bf16.mxu0 0
        %1026 = vmatpush1.bf16.xpose.msra.mxu0 0
        %1027 = vmatprep.subr.bf16.mxu0 0
        %1028 = vmatpush1.bf16.xpose.msra.mxu0 0
        %1029 = vmatprep.subr.bf16.mxu0 0
        %1030 = vmatpush1.bf16.xpose.msra.mxu0 0
        %1031 = vmatprep.subr.bf16.mxu0 0
        %1032 = vmatpush1.bf16.xpose.msra.mxu0 0
        %1033 = vmatprep.subr.bf16.mxu0 0
        %1034 = vmatpush1.bf16.xpose.msra.mxu0 0
        %1035 = vmatprep.subr.bf16.mxu0 0
        %1036 = vmatpush1.bf16.xpose.msra.mxu0 0
        %1037 = vmatprep.subr.bf16.mxu0 0
        %1038 = vmatpush1.bf16.xpose.msra.mxu0 0
        %1039 = vmatprep.subr.bf16.mxu0 0
        %1040 = vmatpush1.bf16.xpose.msra.mxu0 0
        %1041 = vmatprep.subr.bf16.mxu0 0
        %1042 = vmatpush1.bf16.xpose.msra.mxu0 0
        %1043 = vmatprep.subr.bf16.mxu0 0
        %1044 = vmatpush1.bf16.xpose.msra.mxu0 0
        %1045 = vmatprep.subr.bf16.mxu0 0
        %1046 = vmatpush1.bf16.xpose.msra.mxu0 0
        %1047 = vmatprep.subr.bf16.mxu0 0
        %1048 = vmatpush1.bf16.xpose.msra.mxu0 0
        %1049 = vmatprep.mubr.bf16.mxu0 0
        %1050 = vmatmul.mubr.bf16.gmra.mrb[0].mxu0 %v1012
        %v1051 = vpop.f32.mrb[0].mxu0
        %v1052 = vadd.f32 %v574, %v1051
        %v1053 = vpop.f32.mrb[0].mxu0
        %v1054 = vpop.f32.mrb[0].mxu0
        %v1055 = vpop.f32.mrb[0].mxu0
        %1056 = vdwg.mxu0
        %v1057 = vsel %vm666, %v1052, -inf
        %1058 = vmax.xlane.f32.xlu0 %v1057
        %v1059 = vpop.xlane.xlu0 %1058
        %v1060 = vsub.f32 %v1052, %v1059
        %v1061 = vmul.f32 %v1060, 1.442695
        %v1062 = vpow.pop %v1061
        %v1063 = vsel %vm666, %v1062, 0.0
        %1064 = vadd.xlane.f32.xlu0 %v1063
        %v1065 = vpop.xlane.xlu0 %1064
        %v1066 = vrcp.pop %v1065
        %v1067 = vmul.f32 %v1062, %v1066
        %v1068 = vpack.c.bf16 %v1067, %v1067
        %1069 = vrot.lane.b32.xlu0 %v662, 40
        %v1070 = vpop.permute.xlu0 %1069
        %v1072 = vsel %vm666, %v1068, 0
        %v1075 = vsel %vm730, %v1070, 0
        %1077 = vmatprep.subr.bf16.mxu0 0
        %1078 = vmatpush1.bf16.msra.mxu0 %v1075
        %1079 = vmatprep.subr.bf16.mxu0 0
        %1080 = vmatpush1.bf16.msra.mxu0 0
        %1081 = vmatprep.subr.bf16.mxu0 0
        %1082 = vmatpush1.bf16.msra.mxu0 0
        %1083 = vmatprep.subr.bf16.mxu0 0
        %1084 = vmatpush1.bf16.msra.mxu0 0
        %1085 = vmatprep.subr.bf16.mxu0 0
        %1086 = vmatpush1.bf16.msra.mxu0 0
        %1087 = vmatprep.subr.bf16.mxu0 0
        %1088 = vmatpush1.bf16.msra.mxu0 0
        %1089 = vmatprep.subr.bf16.mxu0 0
        %1090 = vmatpush1.bf16.msra.mxu0 0
        %1091 = vmatprep.subr.bf16.mxu0 0
        %1092 = vmatpush1.bf16.msra.mxu0 0
        %1093 = vmatprep.subr.bf16.mxu0 0
        %1094 = vmatpush1.bf16.msra.mxu0 0
        %1095 = vmatprep.subr.bf16.mxu0 0
        %1096 = vmatpush1.bf16.msra.mxu0 0
        %1097 = vmatprep.subr.bf16.mxu0 0
        %1098 = vmatpush1.bf16.msra.mxu0 0
        %1099 = vmatprep.subr.bf16.mxu0 0
        %1100 = vmatpush1.bf16.msra.mxu0 0
        %1101 = vmatprep.subr.bf16.mxu0 0
        %1102 = vmatpush1.bf16.msra.mxu0 0
        %1103 = vmatprep.subr.bf16.mxu0 0
        %1104 = vmatpush1.bf16.msra.mxu0 0
        %1105 = vmatprep.subr.bf16.mxu0 0
        %1106 = vmatpush1.bf16.msra.mxu0 0
        %1107 = vmatprep.subr.bf16.mxu0 0
        %1108 = vmatpush1.bf16.msra.mxu0 0
        %1109 = vmatprep.mubr.bf16.mxu0 0
        %1110 = vmatmul.mubr.bf16.gmra.mrb[0].mxu0 %v1072
        %v1111 = vpop.f32.mrb[0].mxu0
        %v1112 = vadd.f32 0.0, %v1111
        %v1113 = vpop.f32.mrb[0].mxu0
        %v1114 = vpop.f32.mrb[0].mxu0
        %v1115 = vpop.f32.mrb[0].mxu0
        %1116 = vdwg.mxu0
        %1118 = vrot.lane.b32.xlu0 %v1112, 24
        %v1119 = vpop.permute.xlu0 %1118
        %vm1121 = vcmask 261312
        %1122 = vst.msk [vmem:[#allocation2] sm:$0xff] %vm1121, %v1119
        %v1123 = vld [vmem:[#allocation2] sm:$0xff]
        %v1124 = vpack.c.bf16 %v1123, %v1123
        %v1125 = vlaneseq
        %v1126 = vshrl.u32 %v1125, 7
        %v1127 = vsub.s32 4, %v1126
        %v1128 = vrot.slane %v598, %v1127
        %v1133 = vunpack.c.l.b16 %v580
        %v1134 = vunpack.c.l.b16 %v581
        %v1135 = vunpack.c.l.b16 %v582
        %v1136 = vunpack.c.l.b16 %v583
        %v1137 = vpack.c.b16 %v1134, %v1133
        %v1138 = vpack.c.b16 %v1136, %v1135
        %v1142 = vsel %vm618, %v1124, 0
        %1144 = vmatprep.subr.bf16.mxu0 0
        %1145 = vmatpush1.bf16.msra.mxu0 %v1137
        %1146 = vmatprep.subr.bf16.mxu0 0
        %1147 = vmatpush1.bf16.msra.mxu0 %v1138
        %1148 = vmatprep.subr.bf16.mxu0 0
        %1149 = vmatpush1.bf16.msra.mxu0 0
        %1150 = vmatprep.subr.bf16.mxu0 0
        %1151 = vmatpush1.bf16.msra.mxu0 0
        %1152 = vmatprep.subr.bf16.mxu0 0
        %1153 = vmatpush1.bf16.msra.mxu0 0
        %1154 = vmatprep.subr.bf16.mxu0 0
        %1155 = vmatpush1.bf16.msra.mxu0 0
        %1156 = vmatprep.subr.bf16.mxu0 0
        %1157 = vmatpush1.bf16.msra.mxu0 0
        %1158 = vmatprep.subr.bf16.mxu0 0
        %1159 = vmatpush1.bf16.msra.mxu0 0
        %1160 = vmatprep.subr.bf16.mxu0 0
        %1161 = vmatpush1.bf16.msra.mxu0 0
        %1162 = vmatprep.subr.bf16.mxu0 0
        %1163 = vmatpush1.bf16.msra.mxu0 0
        %1164 = vmatprep.subr.bf16.mxu0 0
        %1165 = vmatpush1.bf16.msra.mxu0 0
        %1166 = vmatprep.subr.bf16.mxu0 0
        %1167 = vmatpush1.bf16.msra.mxu0 0
        %1168 = vmatprep.subr.bf16.mxu0 0
        %1169 = vmatpush1.bf16.msra.mxu0 0
        %1170 = vmatprep.subr.bf16.mxu0 0
        %1171 = vmatpush1.bf16.msra.mxu0 0
        %1172 = vmatprep.subr.bf16.mxu0 0
        %1173 = vmatpush1.bf16.msra.mxu0 0
        %1174 = vmatprep.subr.bf16.mxu0 0
        %1175 = vmatpush1.bf16.msra.mxu0 0
        %1176 = vmatprep.mubr.bf16.mxu0 0
        %1177 = vmatmul.mubr.bf16.gmra.mrb[0].mxu0 %v1142
        %v1178 = vpop.f32.mrb[0].mxu0
        %v1179 = vadd.f32 %v1128, %v1178
        %v1180 = vpop.f32.mrb[0].mxu0
        %v1181 = vpop.f32.mrb[0].mxu0
        %v1182 = vpop.f32.mrb[0].mxu0
        %1183 = vdwg.mxu0
        %v1184 = vadd.f32 %v567, %v1179
        %v1185 = vsel %vm618, %v1184, 0.0
        %1186 = vadd.xlane.f32.xlu0 %v1185
        %v1187 = vpop.xlane.xlu0 %1186
        %v1188 = vrcp.pop 32.0
        %v1189 = vmul.f32 %v1187, %v1188
        %v1190 = vsub.f32 %v1184, %v1189
        %v1191 = vmul.f32 %v1190, %v1190
        %v1192 = vsel %vm618, %v1191, 0.0
        %1193 = vadd.xlane.f32.xlu0 %v1192
        %v1194 = vpop.xlane.xlu0 %1193
        %v1195 = vmul.f32 %v1194, %v1188
        %v1196 = vadd.f32 %v1195, 1e-06
        %v1197 = vrsqrt.pop %v1196
        %v1198 = vmul.f32 %v1190, %v1197
        %v1199 = vlaneseq
        %v1200 = vshrl.u32 %v1199, 7
        %v1201 = vsub.s32 0, %v1200
        %v1202 = vrot.slane %v598, %v1201
        %v1203 = vmul.f32 %v1198, %v1202
        %v1204 = vlaneseq
        %v1205 = vshrl.u32 %v1204, 7
        %v1206 = vsub.s32 1, %v1205
        %v1207 = vrot.slane %v598, %v1206
        %v1208 = vadd.f32 %v1203, %v1207
        %v1209 = vpack.c.bf16 %v1208, %v1208
        %v1211 = vlaneseq
        %v1212 = vshrl.u32 %v1211, 7
        %v1213 = vsub.s32 0, %v1212
        %v1214 = vrot.slane %v597, %v1213
        %v1220 = vunpack.c.l.b16 %v584
        %v1221 = vunpack.c.l.b16 %v585
        %v1222 = vunpack.c.l.b16 %v586
        %v1223 = vunpack.c.l.b16 %v587
        %v1224 = vpack.c.b16 %v1221, %v1220
        %v1225 = vpack.c.b16 %v1223, %v1222
        %v1229 = vsel %vm618, %v1209, 0
        %1231 = vmatprep.subr.bf16.mxu0 0
        %1232 = vmatpush1.bf16.msra.mxu0 %v1224
        %1233 = vmatprep.subr.bf16.mxu0 0
        %1234 = vmatpush1.bf16.msra.mxu0 %v1225
        %1235 = vmatprep.subr.bf16.mxu0 0
        %1236 = vmatpush1.bf16.msra.mxu0 0
        %1237 = vmatprep.subr.bf16.mxu0 0
        %1238 = vmatpush1.bf16.msra.mxu0 0
        %1239 = vmatprep.subr.bf16.mxu0 0
        %1240 = vmatpush1.bf16.msra.mxu0 0
        %1241 = vmatprep.subr.bf16.mxu0 0
        %1242 = vmatpush1.bf16.msra.mxu0 0
        %1243 = vmatprep.subr.bf16.mxu0 0
        %1244 = vmatpush1.bf16.msra.mxu0 0
        %1245 = vmatprep.subr.bf16.mxu0 0
        %1246 = vmatpush1.bf16.msra.mxu0 0
        %1247 = vmatprep.subr.bf16.mxu0 0
        %1248 = vmatpush1.bf16.msra.mxu0 0
        %1249 = vmatprep.subr.bf16.mxu0 0
        %1250 = vmatpush1.bf16.msra.mxu0 0
        %1251 = vmatprep.subr.bf16.mxu0 0
        %1252 = vmatpush1.bf16.msra.mxu0 0
        %1253 = vmatprep.subr.bf16.mxu0 0
        %1254 = vmatpush1.bf16.msra.mxu0 0
        %1255 = vmatprep.subr.bf16.mxu0 0
        %1256 = vmatpush1.bf16.msra.mxu0 0
        %1257 = vmatprep.subr.bf16.mxu0 0
        %1258 = vmatpush1.bf16.msra.mxu0 0
        %1259 = vmatprep.subr.bf16.mxu0 0
        %1260 = vmatpush1.bf16.msra.mxu0 0
        %1261 = vmatprep.subr.bf16.mxu0 0
        %1262 = vmatpush1.bf16.msra.mxu0 0
        %1263 = vmatprep.mubr.bf16.mxu0 0
        %1264 = vmatmul.mubr.bf16.gmra.mrb[0].mxu0 %v1229
        %v1265 = vpop.f32.mrb[0].mxu0
        %v1266 = vadd.f32 %v1214, %v1265
        %v1267 = vpop.f32.mrb[0].mxu0
        %v1268 = vpop.f32.mrb[0].mxu0
        %v1269 = vpop.f32.mrb[0].mxu0
        %1270 = vdwg.mxu0
        %v1271 = vmax.f32 %v1266, 0.0
        %v1272 = vpack.c.bf16 %v1271, %v1271
        %v1273 = vlaneseq
        %v1274 = vshrl.u32 %v1273, 7
        %v1275 = vsub.s32 5, %v1274
        %v1276 = vrot.slane %v598, %v1275
        %v1285 = vunpack.c.l.b16 %v588
        %v1286 = vunpack.c.l.b16 %v589
        %v1287 = vunpack.c.l.b16 %v590
        %v1288 = vunpack.c.l.b16 %v591
        %v1289 = vunpack.c.l.b16 %v592
        %v1290 = vunpack.c.l.b16 %v593
        %v1291 = vunpack.c.l.b16 %v594
        %v1292 = vunpack.c.l.b16 %v595
        %v1293 = vpack.c.b16 %v1286, %v1285
        %v1294 = vpack.c.b16 %v1288, %v1287
        %v1295 = vpack.c.b16 %v1290, %v1289
        %v1296 = vpack.c.b16 %v1292, %v1291
        %vm1301 = vcmask 523264
        %v1303 = vsel %vm1301, %v1272, 0
        %1305 = vmatprep.subr.bf16.mxu0 0
        %1306 = vmatpush1.bf16.msra.mxu0 %v1293
        %1307 = vmatprep.subr.bf16.mxu0 0
        %1308 = vmatpush1.bf16.msra.mxu0 %v1294
        %1309 = vmatprep.subr.bf16.mxu0 0
        %1310 = vmatpush1.bf16.msra.mxu0 %v1295
        %1311 = vmatprep.subr.bf16.mxu0 0
        %1312 = vmatpush1.bf16.msra.mxu0 %v1296
        %1313 = vmatprep.subr.bf16.mxu0 0
        %1314 = vmatpush1.bf16.msra.mxu0 0
        %1315 = vmatprep.subr.bf16.mxu0 0
        %1316 = vmatpush1.bf16.msra.mxu0 0
        %1317 = vmatprep.subr.bf16.mxu0 0
        %1318 = vmatpush1.bf16.msra.mxu0 0
        %1319 = vmatprep.subr.bf16.mxu0 0
        %1320 = vmatpush1.bf16.msra.mxu0 0
        %1321 = vmatprep.subr.bf16.mxu0 0
        %1322 = vmatpush1.bf16.msra.mxu0 0
        %1323 = vmatprep.subr.bf16.mxu0 0
        %1324 = vmatpush1.bf16.msra.mxu0 0
        %1325 = vmatprep.subr.bf16.mxu0 0
        %1326 = vmatpush1.bf16.msra.mxu0 0
        %1327 = vmatprep.subr.bf16.mxu0 0
        %1328 = vmatpush1.bf16.msra.mxu0 0
        %1329 = vmatprep.subr.bf16.mxu0 0
        %1330 = vmatpush1.bf16.msra.mxu0 0
        %1331 = vmatprep.subr.bf16.mxu0 0
        %1332 = vmatpush1.bf16.msra.mxu0 0
        %1333 = vmatprep.subr.bf16.mxu0 0
        %1334 = vmatpush1.bf16.msra.mxu0 0
        %1335 = vmatprep.subr.bf16.mxu0 0
        %1336 = vmatpush1.bf16.msra.mxu0 0
        %1337 = vmatprep.mubr.bf16.mxu0 0
        %1338 = vmatmul.mubr.bf16.gmra.mrb[0].mxu0 %v1303
        %v1339 = vpop.f32.mrb[0].mxu0
        %v1340 = vadd.f32 %v1276, %v1339
        %v1341 = vpop.f32.mrb[0].mxu0
        %v1342 = vpop.f32.mrb[0].mxu0
        %v1343 = vpop.f32.mrb[0].mxu0
        %1344 = vdwg.mxu0
        %v1345 = vadd.f32 %v1208, %v1340
        %v1346 = vsel %vm618, %v1345, 0.0
        %1347 = vadd.xlane.f32.xlu0 %v1346
        %v1348 = vpop.xlane.xlu0 %1347
        %v1349 = vmul.f32 %v1348, %v1188
        %v1350 = vsub.f32 %v1345, %v1349
        %v1351 = vmul.f32 %v1350, %v1350
        %v1352 = vsel %vm618, %v1351, 0.0
        %1353 = vadd.xlane.f32.xlu0 %v1352
        %v1354 = vpop.xlane.xlu0 %1353
        %v1355 = vmul.f32 %v1354, %v1188
        %v1356 = vadd.f32 %v1355, 1e-06
        %v1357 = vrsqrt.pop %v1356
        %v1358 = vmul.f32 %v1350, %v1357
        %v1359 = vlaneseq
        %v1360 = vshrl.u32 %v1359, 7
        %v1361 = vsub.s32 2, %v1360
        %v1362 = vrot.slane %v598, %v1361
        %v1363 = vmul.f32 %v1358, %v1362
        %v1364 = vlaneseq
        %v1365 = vshrl.u32 %v1364, 7
        %v1366 = vsub.s32 3, %v1365
        %v1367 = vrot.slane %v598, %v1366
        %v1368 = vadd.f32 %v1363, %v1367
        %1369 = vst.msk [vmem:[%s524] sm:$0xff] %vm618, %v1368
        %s1370 = sand.u32 %s303, 1
        %s1371 = scalar_lea.sflag [#allocation5], %s1370
        %s1372 = sand.u32 %s303, 1
        %s1373 = smul.addr %s1372, 8
        %s1374 = scalar_lea.vmem [#allocation9], %s1373
        // Predicated region
        $region77: #{tpu_custom_call.1} parent=59 // pred_check
          %p1375 = pneg %p313
        $region78: #{tpu_custom_call.1} parent=59 // pred_check_branch
          %1377 = sbr.rel (%p1375) target = $region80
        $region79: #{tpu_custom_call.1} parent=59 // pred_region
          %s1379 = ssub.s32 128, 128
          %1380 = vsyncadd %s1371, %s1379
          %s1381 = smul.addr %s32, 128
          %s1382 = scalar_lea.hbm %s10, %s1381
          %s1384 = sshll.u32 %s1374, 4
          %s1385 = int_to_ptr.vmem [resolvable:$true] %s1384
          %1387 = dma.vmem_to_hbm [thread:$0]  %s1385, 128, %s1382, %s1371
        $region80: #{tpu_custom_call.1} parent=59 // pred_fallthru
          _
      $region60: #{tpu_custom_call.1} parent=5 // pred_fallthru
        _
      %p1388 = scmp.le.s32.totalorder 2, %s23
      // Predicated region
      $region81: #{tpu_custom_call.1} parent=5 // pred_check
        %p1389 = pneg %p1388
      $region82: #{tpu_custom_call.1} parent=5 // pred_check_branch
        %1391 = sbr.rel (%p1389) target = $region84
      $region83: #{tpu_custom_call.1} parent=5 // pred_region
        %s1392 = ssub.s32 %s23, 2
        // Predicated region
        $region85: #{tpu_custom_call.1} parent=83 // pred_check
          %p1393 = pneg %p319
        $region86: #{tpu_custom_call.1} parent=83 // pred_check_branch
          %1395 = sbr.rel (%p1393) target = $region88
        $region87: #{tpu_custom_call.1} parent=83 // pred_region
          %s1396 = sand.u32 %s304, 1
          %s1397 = scalar_lea.sflag [#allocation5], %s1396
          %s1398 = sand.u32 %s304, 1
          %s1399 = smul.addr %s1398, 8
          %s1400 = scalar_lea.vmem [#allocation9], %s1399
          %1401 = dma.done %s1397, 128
        $region88: #{tpu_custom_call.1} parent=83 // pred_fallthru
          _
      $region84: #{tpu_custom_call.1} parent=5 // pred_fallthru
        _
    $region6: #{tpu_custom_call.1} parent=1 // loop_footer
      %s27 = sadd.s32 1, %s23
    $region7: #{tpu_custom_call.1} parent=1 // loop_footer_branch
      %22 = sbr.rel target = $region3
    $region8: #{tpu_custom_call.1} parent=1 // loop_exit
      _
    %1402 = vsyncpa [#allocation4], 1
    %s1403 = scalar_lea.sflag [#allocation4], 1
    %1404 = vsyncpa %s1403, 1
    %1405 = vsyncpa [#allocation7], 1
    %s1406 = scalar_lea.sflag [#allocation7], 1
    %1407 = vsyncpa %s1406, 1
    %1408 = vsyncpa [#allocation5], 1
    %s1409 = scalar_lea.sflag [#allocation5], 1
    %1410 = vsyncpa %s1409, 1

</llo_original>
